<compile_context>
chip_gen: v7x
topology: tpu7x:2x2x1
jax: 0.10.0
libtpu: 0.0.40
codegen_flags: <defaults>
</compile_context>

<pallas_src>
import functools
from typing import NamedTuple

import jax
import jax.numpy as jnp
from jax.experimental import pallas as pl
from jax.experimental.pallas import tpu as pltpu

LANE = 128      # vreg lane width: last dim of every padded operand
SUBLANE = 8     # vreg sublane width: batch rows / bias rows padded to this


class CVAEConfig(NamedTuple):
    n_past: int
    n_dest: int
    n_lat: int
    n_dec: int
    fdim: int
    zdim: int
    k_pad: int   # fan-in padding of every weight slab (multiple of 8)


# ----------------------------------------------------------------------------
# Padding / packing helpers (run once at parameter-prep time, not per forward)
# ----------------------------------------------------------------------------
def _round_up(v, m):
    return (v + m - 1) // m * m


def _pad_w(w, k_pad):
    w = jnp.asarray(w, jnp.float32)
    assert w.ndim == 2 and w.shape[0] <= k_pad and w.shape[1] <= LANE, w.shape
    return jnp.zeros((k_pad, LANE), jnp.float32).at[: w.shape[0], : w.shape[1]].set(w)


def _pad_b(b):
    b = jnp.asarray(b, jnp.float32).reshape(-1)
    assert b.shape[0] <= LANE, b.shape
    return jnp.zeros((LANE,), jnp.float32).at[: b.shape[0]].set(b)


def _pad_rows(a, bpad):
    a = jnp.asarray(a, jnp.float32)
    assert a.ndim == 2 and a.shape[0] <= bpad and a.shape[1] <= LANE, a.shape
    return jnp.zeros((bpad, LANE), jnp.float32).at[: a.shape[0], : a.shape[1]].set(a)


def _stack_params(w_list, b_list):
    """Stack per-layer slabs into one bf16 weight tensor + one f32 bias tensor."""
    w_stack = jnp.stack(w_list).astype(jnp.bfloat16)          # (n_w, K_PAD, 128)
    n_b = len(b_list)
    n_b_pad = _round_up(max(n_b, 1), SUBLANE)
    b_stack = jnp.zeros((n_b_pad, LANE), jnp.float32).at[:n_b].set(jnp.stack(b_list))
    return w_stack, b_stack


# ----------------------------------------------------------------------------
# Fused Pallas kernels
# ----------------------------------------------------------------------------
def _fused_train_kernel(x_ref, next_ref, eps_ref, w_ref, b_ref, out_ref,
                        *, n_past, n_dest, n_lat, n_dec, k_pad):
    """Full training-mode CVAE forward in one kernel invocation.

    w_ref: (n_w, k_pad, 128) bf16 stacked weight slabs (static-indexed).
    b_ref: (n_b_pad, 128)    f32  stacked bias rows    (static-indexed).
    out_ref: (3, bpad, 128)  f32  [generated, mu, logvar] stacked.
    """
    wi = 0
    bi = 0
    b_all = b_ref[...]                                   # small, single load

    def matmul(h, idx):
        # Contract only the live lanes; weight rows beyond the real fan-in are
        # zero, activation lanes beyond the real width are zero.
        lhs = h[:, :k_pad].astype(jnp.bfloat16)
        return jnp.dot(lhs, w_ref[idx], preferred_element_type=jnp.float32)

    def bias(idx):
        return b_all[idx:idx + 1, :]                     # (1, 128), broadcast

    def dense(h, relu):
        nonlocal wi, bi
        y = matmul(h, wi) + bias(bi)
        wi += 1
        bi += 1
        return jnp.maximum(y, 0.0) if relu else y

    # encoder_past MLP
    h = x_ref[...]
    for i in range(n_past):
        h = dense(h, relu=(i != n_past - 1))
    ftraj = h

    # encoder_dest MLP
    h = next_ref[...]
    for i in range(n_dest):
        h = dense(h, relu=(i != n_dest - 1))
    ns_features = h

    # encoder_latent MLP.  First layer replaces concat(ftraj, ns_features):
    #   concat @ W0 == ftraj @ W0[:fdim] + ns_features @ W0[fdim:]
    h = matmul(ftraj, wi) + matmul(ns_features, wi + 1) + bias(bi)
    wi += 2
    bi += 1
    h = jnp.maximum(h, 0.0)
    for _ in range(n_lat - 2):
        h = dense(h, relu=True)
    # Last latent layer split into mu / logvar columns (lane-aligned outputs).
    mu = matmul(h, wi) + bias(bi)
    logvar = matmul(h, wi + 1) + bias(bi + 1)
    wi += 2
    bi += 2

    # Reparameterization: z = eps * exp(0.5 * logvar) + mu   (EUP exp, f32)
    # Padded lanes stay zero: eps pad is 0 and mu pad is 0.
    z = eps_ref[...] * jnp.exp(logvar * 0.5) + mu

    # decoder MLP.  First layer replaces concat(ftraj, z).
    h = matmul(ftraj, wi) + matmul(z, wi + 1) + bias(bi)
    wi += 2
    bi += 1
    h = jnp.maximum(h, 0.0)
    for i in range(n_dec - 1):
        h = dense(h, relu=(i != n_dec - 2))

    out_ref[0] = h          # generated
    out_ref[1] = mu
    out_ref[2] = logvar


def _fused_eval_kernel(x_ref, z_ref, w_ref, b_ref, gen_ref,
                       *, n_past, n_dec, k_pad):
    """Eval-mode CVAE forward (z sampled externally) in one kernel."""
    wi = 0
    bi = 0
    b_all = b_ref[...]

    def matmul(h, idx):
        lhs = h[:, :k_pad].astype(jnp.bfloat16)
        return jnp.dot(lhs, w_ref[idx], preferred_element_type=jnp.float32)

    def bias(idx):
        return b_all[idx:idx + 1, :]

    def dense(h, relu):
        nonlocal wi, bi
        y = matmul(h, wi) + bias(bi)
        wi += 1
        bi += 1
        return jnp.maximum(y, 0.0) if relu else y

    h = x_ref[...]
    for i in range(n_past):
        h = dense(h, relu=(i != n_past - 1))
    ftraj = h

    # decoder first layer replaces concat(ftraj, z)
    h = matmul(ftraj, wi) + matmul(z_ref[...], wi + 1) + bias(bi)
    wi += 2
    bi += 1
    h = jnp.maximum(h, 0.0)
    for i in range(n_dec - 1):
        h = dense(h, relu=(i != n_dec - 2))

    gen_ref[...] = h


# ----------------------------------------------------------------------------
# Jitted forward wrappers (single pallas_call each)
# ----------------------------------------------------------------------------
@functools.partial(jax.jit, static_argnames=("cfg",))
def cvae_forward_train(w_stack, b_stack, x, next_step, eps, *, cfg):
    """Training-mode forward: returns (generated, mu, logvar)."""
    B = x.shape[0]
    bpad = max(SUBLANE, _round_up(B, SUBLANE))
    xp = _pad_rows(x, bpad)
    nsp = _pad_rows(next_step, bpad)
    epp = _pad_rows(eps, bpad)

    vmem = pl.BlockSpec(memory_space=pltpu.MemorySpace.VMEM)
    kernel = functools.partial(
        _fused_train_kernel,
        n_past=cfg.n_past, n_dest=cfg.n_dest, n_lat=cfg.n_lat,
        n_dec=cfg.n_dec, k_pad=cfg.k_pad)

    n_w = w_stack.shape[0]
    cost = pl.CostEstimate(
        flops=2 * n_w * bpad * cfg.k_pad * LANE,
        transcendentals=bpad * LANE,
        bytes_accessed=(xp.size + nsp.size + epp.size + b_stack.size) * 4
                       + w_stack.size * 2 + 3 * bpad * LANE * 4)

    out_p = pl.pallas_call(
        kernel,
        out_shape=jax.ShapeDtypeStruct((3, bpad, LANE), jnp.float32),
        in_specs=[vmem] * 5,
        out_specs=vmem,
        cost_estimate=cost,
    )(xp, nsp, epp, w_stack, b_stack)

    return (out_p[0, :B, :2],
            out_p[1, :B, :cfg.zdim],
            out_p[2, :B, :cfg.zdim])


@functools.partial(jax.jit, static_argnames=("cfg",))
def cvae_forward_eval(w_stack, b_stack, x, z, *, cfg):
    """Eval-mode forward: z is sampled externally as N(0, sigma)."""
    B = x.shape[0]
    bpad = max(SUBLANE, _round_up(B, SUBLANE))
    xp = _pad_rows(x, bpad)
    zp = _pad_rows(z, bpad)

    vmem = pl.BlockSpec(memory_space=pltpu.MemorySpace.VMEM)
    kernel = functools.partial(_fused_eval_kernel,
                               n_past=cfg.n_past, n_dec=cfg.n_dec,
                               k_pad=cfg.k_pad)

    n_w = w_stack.shape[0]
    cost = pl.CostEstimate(
        flops=2 * n_w * bpad * cfg.k_pad * LANE,
        transcendentals=0,
        bytes_accessed=(xp.size + zp.size + b_stack.size) * 4
                       + w_stack.size * 2 + bpad * LANE * 4)

    gen_p = pl.pallas_call(
        kernel,
        out_shape=jax.ShapeDtypeStruct((bpad, LANE), jnp.float32),
        in_specs=[vmem] * 4,
        out_specs=vmem,
        cost_estimate=cost,
    )(xp, zp, w_stack, b_stack)

    return gen_p[:B, :2]


# ----------------------------------------------------------------------------
# Parameter init (mirrors nn.Linear default U(-1/sqrt(in), 1/sqrt(in)))
# Weights are stored as (in_features, out_features) so the kernel computes
# y = x @ W + b directly on the MXU.
# ----------------------------------------------------------------------------
def init_linear(key, in_dim, out_dim):
    kw, kb = jax.random.split(key)
    bound = 1.0 / float(in_dim) ** 0.5
    w = jax.random.uniform(kw, (in_dim, out_dim), jnp.float32, -bound, bound)
    b = jax.random.uniform(kb, (out_dim,), jnp.float32, -bound, bound)
    return w, b


def init_mlp(key, input_dim, output_dim, hidden_size):
    dims = [input_dim, *hidden_size, output_dim]
    keys = jax.random.split(key, len(dims) - 1)
    return [init_linear(keys[i], dims[i], dims[i + 1]) for i in range(len(dims) - 1)]


def init_cvae_raw(key, *, enc_past_size, enc_dest_size, enc_latent_size, dec_size,
                  fdim, zdim, past_length):
    k1, k2, k3, k4 = jax.random.split(key, 4)
    return {
        "encoder_past": init_mlp(k1, (past_length + 1) * 2, fdim, enc_past_size),
        "encoder_dest": init_mlp(k2, 2, fdim, enc_dest_size),
        "encoder_latent": init_mlp(k3, 2 * fdim, 2 * zdim, enc_latent_size),
        "decoder": init_mlp(k4, fdim + zdim, 2, dec_size),
    }


def prepare_cvae(raw, *, fdim, zdim):
    """Pre-bake stacked, lane-padded, bf16 kernel-ready slabs + static config."""
    enc_past, enc_dest = raw["encoder_past"], raw["encoder_dest"]
    enc_lat, dec = raw["encoder_latent"], raw["decoder"]
    assert len(enc_lat) >= 2 and len(dec) >= 2

    # K_PAD = max fan-in of any (post-split) weight slab, rounded up to 8.
    fanins = []
    widths = []
    for w, _ in enc_past + enc_dest:
        fanins.append(w.shape[0]); widths.append(w.shape[1])
    fanins += [fdim, fdim]                      # latent first layer split
    for w, _ in enc_lat:
        widths.append(w.shape[1])
    for w, _ in enc_lat[1:]:
        fanins.append(w.shape[0])
    fanins += [fdim, zdim]                      # decoder first layer split
    for w, _ in dec:
        widths.append(w.shape[1])
    for w, _ in dec[1:]:
        fanins.append(w.shape[0])
    k_pad = max(SUBLANE, _round_up(max(fanins), SUBLANE))
    assert k_pad <= LANE and max(widths) <= LANE, (k_pad, max(widths))

    pw = functools.partial(_pad_w, k_pad=k_pad)

    # ---- training-mode parameter stack (consumption order == kernel order)
    w_list, b_list = [], []
    for w, b in enc_past:
        w_list.append(pw(w)); b_list.append(_pad_b(b))
    for w, b in enc_dest:
        w_list.append(pw(w)); b_list.append(_pad_b(b))
    # encoder_latent: first layer split over concat(ftraj, ns_features) rows
    w0, b0 = enc_lat[0]
    w_list += [pw(w0[:fdim]), pw(w0[fdim:])]
    b_list.append(_pad_b(b0))
    for w, b in enc_lat[1:-1]:
        w_list.append(pw(w)); b_list.append(_pad_b(b))
    # encoder_latent: last layer split into mu / logvar columns
    wl, bl = enc_lat[-1]
    w_list += [pw(wl[:, :zdim]), pw(wl[:, zdim:])]
    b_list += [_pad_b(bl[:zdim]), _pad_b(bl[zdim:])]
    # decoder: first layer split over concat(ftraj, z) rows
    wd0, bd0 = dec[0]
    w_list += [pw(wd0[:fdim]), pw(wd0[fdim:])]
    b_list.append(_pad_b(bd0))
    for w, b in dec[1:]:
        w_list.append(pw(w)); b_list.append(_pad_b(b))
    train_params = _stack_params(w_list, b_list)

    # ---- eval-mode parameter stack
    w_list, b_list = [], []
    for w, b in enc_past:
        w_list.append(pw(w)); b_list.append(_pad_b(b))
    w_list += [pw(wd0[:fdim]), pw(wd0[fdim:])]
    b_list.append(_pad_b(bd0))
    for w, b in dec[1:]:
        w_list.append(pw(w)); b_list.append(_pad_b(b))
    eval_params = _stack_params(w_list, b_list)

    cfg = CVAEConfig(n_past=len(enc_past), n_dest=len(enc_dest),
                     n_lat=len(enc_lat), n_dec=len(dec),
                     fdim=fdim, zdim=zdim, k_pad=k_pad)
    return train_params, eval_params, cfg


# ----------------------------------------------------------------------------
# Pure-JAX references (for correctness verification)
#   bf16=True  -> same bf16-weight / f32-accumulate math as the kernel (tight)
#   bf16=False -> original full-f32 semantics (loose sanity check)
# ----------------------------------------------------------------------------
def _ref_mlp(layers, h, bf16):
    for i, (w, b) in enumerate(layers):
        if bf16:
            h = jnp.dot(h.astype(jnp.bfloat16), w.astype(jnp.bfloat16),
                        preferred_element_type=jnp.float32) + b
        else:
            h = h @ w + b
        if i != len(layers) - 1:
            h = jnp.maximum(h, 0.0)
    return h


def _ref_forward_train(raw, x, next_step, eps, zdim, bf16):
    ftraj = _ref_mlp(raw["encoder_past"], x, bf16)
    ns = _ref_mlp(raw["encoder_dest"], next_step, bf16)
    latent = _ref_mlp(raw["encoder_latent"],
                      jnp.concatenate([ftraj, ns], axis=1), bf16)
    mu, logvar = latent[:, :zdim], latent[:, zdim:]
    z = eps * jnp.exp(0.5 * logvar) + mu
    gen = _ref_mlp(raw["decoder"], jnp.concatenate([ftraj, z], axis=1), bf16)
    return gen, mu, logvar


def _ref_forward_eval(raw, x, z, bf16):
    ftraj = _ref_mlp(raw["encoder_past"], x, bf16)
    return _ref_mlp(raw["decoder"], jnp.concatenate([ftraj, z], axis=1), bf16)


# ----------------------------------------------------------------------------
# Main
# ----------------------------------------------------------------------------
if __name__ == "__main__":
    batch = 2
    past_length = 7          # -> encoder_past input dim = (7+1)*2 = 16
    fdim = 16
    zdim = 8
    sigma = 1.3
    enc_past_size = (32, 16)
    enc_dest_size = (16, 8)
    enc_latent_size = (16, 16)
    dec_size = (32, 16)

    root = jax.random.PRNGKey(0)
    k_params, k_x, k_next, k_eps, k_z = jax.random.split(root, 5)

    raw = init_cvae_raw(
        k_params,
        enc_past_size=enc_past_size,
        enc_dest_size=enc_dest_size,
        enc_latent_size=enc_latent_size,
        dec_size=dec_size,
        fdim=fdim,
        zdim=zdim,
        past_length=past_length,
    )
    train_params, eval_params, cfg = prepare_cvae(raw, fdim=fdim, zdim=zdim)

    x = jax.random.normal(k_x, (batch, (past_length + 1) * 2), jnp.float32)
    next_step = jax.random.normal(k_next, (batch, 2), jnp.float32)
    eps = jax.random.normal(k_eps, (batch, zdim), jnp.float32)
    z_eval = sigma * jax.random.normal(k_z, (batch, zdim), jnp.float32)

    # Training-mode forward (one fused Pallas kernel).
    generated, mu, logvar = cvae_forward_train(*train_params, x, next_step, eps,
                                               cfg=cfg)
    # Eval-mode forward (one fused Pallas kernel).
    generated_eval = cvae_forward_eval(*eval_params, x, z_eval, cfg=cfg)

    jax.block_until_ready((generated, mu, logvar, generated_eval))

    assert generated.shape == (batch, 2)
    assert mu.shape == (batch, zdim)
    assert logvar.shape == (batch, zdim)
    assert generated_eval.shape == (batch, 2)

    # Tight check against a bf16-weight / f32-accumulate reference (same
    # quantization as the kernel).
    g_ref, mu_ref, lv_ref = _ref_forward_train(raw, x, next_step, eps, zdim, True)
    ge_ref = _ref_forward_eval(raw, x, z_eval, True)
    assert bool(jnp.allclose(generated, g_ref, rtol=5e-3, atol=5e-3))
    assert bool(jnp.allclose(mu, mu_ref, rtol=5e-3, atol=5e-3))
    assert bool(jnp.allclose(logvar, lv_ref, rtol=5e-3, atol=5e-3))
    assert bool(jnp.allclose(generated_eval, ge_ref, rtol=5e-3, atol=5e-3))

    # Loose sanity check against the original full-f32 semantics.
    g32, mu32, lv32 = _ref_forward_train(raw, x, next_step, eps, zdim, False)
    ge32 = _ref_forward_eval(raw, x, z_eval, False)
    assert bool(jnp.allclose(generated, g32, rtol=5e-2, atol=5e-2))
    assert bool(jnp.allclose(mu, mu32, rtol=5e-2, atol=5e-2))
    assert bool(jnp.allclose(logvar, lv32, rtol=5e-2, atol=5e-2))
    assert bool(jnp.allclose(generated_eval, ge32, rtol=5e-2, atol=5e-2))

    print("KERNEL_OK")
</pallas_src>

<mosaic_0001>
module attributes {stable_mosaic.version = 11 : i64} {
  func.func @_fused_train_kernel(%arg0: memref<8x128xf32, #tpu.memory_space<vmem>>, %arg1: memref<8x128xf32, #tpu.memory_space<vmem>>, %arg2: memref<8x128xf32, #tpu.memory_space<vmem>>, %arg3: memref<15x32x128xbf16, #tpu.memory_space<vmem>>, %arg4: memref<16x128xf32, #tpu.memory_space<vmem>>, %arg5: memref<3x8x128xf32, #tpu.memory_space<vmem>>) attributes {dimension_semantics = [], scalar_prefetch = 0 : i64, scratch_operands = 0 : i64, tpu.core_type = #tpu.core_type<tc>} {
    %c0 = arith.constant 0 : index
    %c0_0 = arith.constant 0 : index
    %0 = vector.load %arg4[%c0, %c0_0] : memref<16x128xf32, #tpu.memory_space<vmem>>, vector<16x128xf32>
    %c0_1 = arith.constant 0 : index
    %c0_2 = arith.constant 0 : index
    %1 = vector.load %arg0[%c0_1, %c0_2] : memref<8x128xf32, #tpu.memory_space<vmem>>, vector<8x128xf32>
    %2 = vector.extract_strided_slice %1 {offsets = [0, 0], sizes = [8, 32], strides = [1, 1]} : vector<8x128xf32> to vector<8x32xf32>
    %3 = arith.truncf %2 : vector<8x32xf32> to vector<8x32xbf16>
    %c0_3 = arith.constant 0 : index
    %c0_4 = arith.constant 0 : index
    %c0_5 = arith.constant 0 : index
    %4 = vector.load %arg3[%c0_3, %c0_4, %c0_5] : memref<15x32x128xbf16, #tpu.memory_space<vmem>>, vector<1x32x128xbf16>
    %5 = vector.shape_cast %4 : vector<1x32x128xbf16> to vector<32x128xbf16>
    %cst = arith.constant dense<0.000000e+00> : vector<8x128xf32>
    %6 = tpu.matmul %3, %5, %cst {dimension_numbers = #tpu.dot_dimension_numbers<[1], [0], [0], [1], [0, 0, 1, 1], [], []>} : vector<8x32xbf16>, vector<32x128xbf16>, vector<8x128xf32> -> vector<8x128xf32>
    %7 = vector.extract_strided_slice %0 {offsets = [0, 0], sizes = [1, 128], strides = [1, 1]} : vector<16x128xf32> to vector<1x128xf32>
    %8 = vector.broadcast %7 : vector<1x128xf32> to vector<8x128xf32>
    %9 = arith.addf %6, %8 : vector<8x128xf32>
    %cst_6 = arith.constant 0.000000e+00 : f32
    %10 = vector.broadcast %cst_6 : f32 to vector<8x128xf32>
    %11 = arith.maximumf %9, %10 : vector<8x128xf32>
    %12 = vector.extract_strided_slice %11 {offsets = [0, 0], sizes = [8, 32], strides = [1, 1]} : vector<8x128xf32> to vector<8x32xf32>
    %13 = arith.truncf %12 : vector<8x32xf32> to vector<8x32xbf16>
    %c1 = arith.constant 1 : index
    %c0_7 = arith.constant 0 : index
    %c0_8 = arith.constant 0 : index
    %14 = vector.load %arg3[%c1, %c0_7, %c0_8] : memref<15x32x128xbf16, #tpu.memory_space<vmem>>, vector<1x32x128xbf16>
    %15 = vector.shape_cast %14 : vector<1x32x128xbf16> to vector<32x128xbf16>
    %cst_9 = arith.constant dense<0.000000e+00> : vector<8x128xf32>
    %16 = tpu.matmul %13, %15, %cst_9 {dimension_numbers = #tpu.dot_dimension_numbers<[1], [0], [0], [1], [0, 0, 1, 1], [], []>} : vector<8x32xbf16>, vector<32x128xbf16>, vector<8x128xf32> -> vector<8x128xf32>
    %17 = vector.extract_strided_slice %0 {offsets = [1, 0], sizes = [1, 128], strides = [1, 1]} : vector<16x128xf32> to vector<1x128xf32>
    %18 = vector.broadcast %17 : vector<1x128xf32> to vector<8x128xf32>
    %19 = arith.addf %16, %18 : vector<8x128xf32>
    %cst_10 = arith.constant 0.000000e+00 : f32
    %20 = vector.broadcast %cst_10 : f32 to vector<8x128xf32>
    %21 = arith.maximumf %19, %20 : vector<8x128xf32>
    %22 = vector.extract_strided_slice %21 {offsets = [0, 0], sizes = [8, 32], strides = [1, 1]} : vector<8x128xf32> to vector<8x32xf32>
    %23 = arith.truncf %22 : vector<8x32xf32> to vector<8x32xbf16>
    %c2 = arith.constant 2 : index
    %c0_11 = arith.constant 0 : index
    %c0_12 = arith.constant 0 : index
    %24 = vector.load %arg3[%c2, %c0_11, %c0_12] : memref<15x32x128xbf16, #tpu.memory_space<vmem>>, vector<1x32x128xbf16>
    %25 = vector.shape_cast %24 : vector<1x32x128xbf16> to vector<32x128xbf16>
    %cst_13 = arith.constant dense<0.000000e+00> : vector<8x128xf32>
    %26 = tpu.matmul %23, %25, %cst_13 {dimension_numbers = #tpu.dot_dimension_numbers<[1], [0], [0], [1], [0, 0, 1, 1], [], []>} : vector<8x32xbf16>, vector<32x128xbf16>, vector<8x128xf32> -> vector<8x128xf32>
    %27 = vector.extract_strided_slice %0 {offsets = [2, 0], sizes = [1, 128], strides = [1, 1]} : vector<16x128xf32> to vector<1x128xf32>
    %28 = vector.broadcast %27 : vector<1x128xf32> to vector<8x128xf32>
    %29 = arith.addf %26, %28 : vector<8x128xf32>
    %c0_14 = arith.constant 0 : index
    %c0_15 = arith.constant 0 : index
    %30 = vector.load %arg1[%c0_14, %c0_15] : memref<8x128xf32, #tpu.memory_space<vmem>>, vector<8x128xf32>
    %31 = vector.extract_strided_slice %30 {offsets = [0, 0], sizes = [8, 32], strides = [1, 1]} : vector<8x128xf32> to vector<8x32xf32>
    %32 = arith.truncf %31 : vector<8x32xf32> to vector<8x32xbf16>
    %c3 = arith.constant 3 : index
    %c0_16 = arith.constant 0 : index
    %c0_17 = arith.constant 0 : index
    %33 = vector.load %arg3[%c3, %c0_16, %c0_17] : memref<15x32x128xbf16, #tpu.memory_space<vmem>>, vector<1x32x128xbf16>
    %34 = vector.shape_cast %33 : vector<1x32x128xbf16> to vector<32x128xbf16>
    %cst_18 = arith.constant dense<0.000000e+00> : vector<8x128xf32>
    %35 = tpu.matmul %32, %34, %cst_18 {dimension_numbers = #tpu.dot_dimension_numbers<[1], [0], [0], [1], [0, 0, 1, 1], [], []>} : vector<8x32xbf16>, vector<32x128xbf16>, vector<8x128xf32> -> vector<8x128xf32>
    %36 = vector.extract_strided_slice %0 {offsets = [3, 0], sizes = [1, 128], strides = [1, 1]} : vector<16x128xf32> to vector<1x128xf32>
    %37 = vector.broadcast %36 : vector<1x128xf32> to vector<8x128xf32>
    %38 = arith.addf %35, %37 : vector<8x128xf32>
    %cst_19 = arith.constant 0.000000e+00 : f32
    %39 = vector.broadcast %cst_19 : f32 to vector<8x128xf32>
    %40 = arith.maximumf %38, %39 : vector<8x128xf32>
    %41 = vector.extract_strided_slice %40 {offsets = [0, 0], sizes = [8, 32], strides = [1, 1]} : vector<8x128xf32> to vector<8x32xf32>
    %42 = arith.truncf %41 : vector<8x32xf32> to vector<8x32xbf16>
    %c4 = arith.constant 4 : index
    %c0_20 = arith.constant 0 : index
    %c0_21 = arith.constant 0 : index
    %43 = vector.load %arg3[%c4, %c0_20, %c0_21] : memref<15x32x128xbf16, #tpu.memory_space<vmem>>, vector<1x32x128xbf16>
    %44 = vector.shape_cast %43 : vector<1x32x128xbf16> to vector<32x128xbf16>
    %cst_22 = arith.constant dense<0.000000e+00> : vector<8x128xf32>
    %45 = tpu.matmul %42, %44, %cst_22 {dimension_numbers = #tpu.dot_dimension_numbers<[1], [0], [0], [1], [0, 0, 1, 1], [], []>} : vector<8x32xbf16>, vector<32x128xbf16>, vector<8x128xf32> -> vector<8x128xf32>
    %46 = vector.extract_strided_slice %0 {offsets = [4, 0], sizes = [1, 128], strides = [1, 1]} : vector<16x128xf32> to vector<1x128xf32>
    %47 = vector.broadcast %46 : vector<1x128xf32> to vector<8x128xf32>
    %48 = arith.addf %45, %47 : vector<8x128xf32>
    %cst_23 = arith.constant 0.000000e+00 : f32
    %49 = vector.broadcast %cst_23 : f32 to vector<8x128xf32>
    %50 = arith.maximumf %48, %49 : vector<8x128xf32>
    %51 = vector.extract_strided_slice %50 {offsets = [0, 0], sizes = [8, 32], strides = [1, 1]} : vector<8x128xf32> to vector<8x32xf32>
    %52 = arith.truncf %51 : vector<8x32xf32> to vector<8x32xbf16>
    %c5 = arith.constant 5 : index
    %c0_24 = arith.constant 0 : index
    %c0_25 = arith.constant 0 : index
    %53 = vector.load %arg3[%c5, %c0_24, %c0_25] : memref<15x32x128xbf16, #tpu.memory_space<vmem>>, vector<1x32x128xbf16>
    %54 = vector.shape_cast %53 : vector<1x32x128xbf16> to vector<32x128xbf16>
    %cst_26 = arith.constant dense<0.000000e+00> : vector<8x128xf32>
    %55 = tpu.matmul %52, %54, %cst_26 {dimension_numbers = #tpu.dot_dimension_numbers<[1], [0], [0], [1], [0, 0, 1, 1], [], []>} : vector<8x32xbf16>, vector<32x128xbf16>, vector<8x128xf32> -> vector<8x128xf32>
    %56 = vector.extract_strided_slice %0 {offsets = [5, 0], sizes = [1, 128], strides = [1, 1]} : vector<16x128xf32> to vector<1x128xf32>
    %57 = vector.broadcast %56 : vector<1x128xf32> to vector<8x128xf32>
    %58 = arith.addf %55, %57 : vector<8x128xf32>
    %59 = vector.extract_strided_slice %29 {offsets = [0, 0], sizes = [8, 32], strides = [1, 1]} : vector<8x128xf32> to vector<8x32xf32>
    %60 = arith.truncf %59 : vector<8x32xf32> to vector<8x32xbf16>
    %c6 = arith.constant 6 : index
    %c0_27 = arith.constant 0 : index
    %c0_28 = arith.constant 0 : index
    %61 = vector.load %arg3[%c6, %c0_27, %c0_28] : memref<15x32x128xbf16, #tpu.memory_space<vmem>>, vector<1x32x128xbf16>
    %62 = vector.shape_cast %61 : vector<1x32x128xbf16> to vector<32x128xbf16>
    %cst_29 = arith.constant dense<0.000000e+00> : vector<8x128xf32>
    %63 = tpu.matmul %60, %62, %cst_29 {dimension_numbers = #tpu.dot_dimension_numbers<[1], [0], [0], [1], [0, 0, 1, 1], [], []>} : vector<8x32xbf16>, vector<32x128xbf16>, vector<8x128xf32> -> vector<8x128xf32>
    %64 = vector.extract_strided_slice %58 {offsets = [0, 0], sizes = [8, 32], strides = [1, 1]} : vector<8x128xf32> to vector<8x32xf32>
    %65 = arith.truncf %64 : vector<8x32xf32> to vector<8x32xbf16>
    %c7 = arith.constant 7 : index
    %c0_30 = arith.constant 0 : index
    %c0_31 = arith.constant 0 : index
    %66 = vector.load %arg3[%c7, %c0_30, %c0_31] : memref<15x32x128xbf16, #tpu.memory_space<vmem>>, vector<1x32x128xbf16>
    %67 = vector.shape_cast %66 : vector<1x32x128xbf16> to vector<32x128xbf16>
    %cst_32 = arith.constant dense<0.000000e+00> : vector<8x128xf32>
    %68 = tpu.matmul %65, %67, %cst_32 {dimension_numbers = #tpu.dot_dimension_numbers<[1], [0], [0], [1], [0, 0, 1, 1], [], []>} : vector<8x32xbf16>, vector<32x128xbf16>, vector<8x128xf32> -> vector<8x128xf32>
    %69 = arith.addf %63, %68 : vector<8x128xf32>
    %70 = vector.extract_strided_slice %0 {offsets = [6, 0], sizes = [1, 128], strides = [1, 1]} : vector<16x128xf32> to vector<1x128xf32>
    %71 = vector.broadcast %70 : vector<1x128xf32> to vector<8x128xf32>
    %72 = arith.addf %69, %71 : vector<8x128xf32>
    %cst_33 = arith.constant 0.000000e+00 : f32
    %73 = vector.broadcast %cst_33 : f32 to vector<8x128xf32>
    %74 = arith.maximumf %72, %73 : vector<8x128xf32>
    %75 = vector.extract_strided_slice %74 {offsets = [0, 0], sizes = [8, 32], strides = [1, 1]} : vector<8x128xf32> to vector<8x32xf32>
    %76 = arith.truncf %75 : vector<8x32xf32> to vector<8x32xbf16>
    %c8 = arith.constant 8 : index
    %c0_34 = arith.constant 0 : index
    %c0_35 = arith.constant 0 : index
    %77 = vector.load %arg3[%c8, %c0_34, %c0_35] : memref<15x32x128xbf16, #tpu.memory_space<vmem>>, vector<1x32x128xbf16>
    %78 = vector.shape_cast %77 : vector<1x32x128xbf16> to vector<32x128xbf16>
    %cst_36 = arith.constant dense<0.000000e+00> : vector<8x128xf32>
    %79 = tpu.matmul %76, %78, %cst_36 {dimension_numbers = #tpu.dot_dimension_numbers<[1], [0], [0], [1], [0, 0, 1, 1], [], []>} : vector<8x32xbf16>, vector<32x128xbf16>, vector<8x128xf32> -> vector<8x128xf32>
    %80 = vector.extract_strided_slice %0 {offsets = [7, 0], sizes = [1, 128], strides = [1, 1]} : vector<16x128xf32> to vector<1x128xf32>
    %81 = vector.broadcast %80 : vector<1x128xf32> to vector<8x128xf32>
    %82 = arith.addf %79, %81 : vector<8x128xf32>
    %cst_37 = arith.constant 0.000000e+00 : f32
    %83 = vector.broadcast %cst_37 : f32 to vector<8x128xf32>
    %84 = arith.maximumf %82, %83 : vector<8x128xf32>
    %85 = vector.extract_strided_slice %84 {offsets = [0, 0], sizes = [8, 32], strides = [1, 1]} : vector<8x128xf32> to vector<8x32xf32>
    %86 = arith.truncf %85 : vector<8x32xf32> to vector<8x32xbf16>
    %c9 = arith.constant 9 : index
    %c0_38 = arith.constant 0 : index
    %c0_39 = arith.constant 0 : index
    %87 = vector.load %arg3[%c9, %c0_38, %c0_39] : memref<15x32x128xbf16, #tpu.memory_space<vmem>>, vector<1x32x128xbf16>
    %88 = vector.shape_cast %87 : vector<1x32x128xbf16> to vector<32x128xbf16>
    %cst_40 = arith.constant dense<0.000000e+00> : vector<8x128xf32>
    %89 = tpu.matmul %86, %88, %cst_40 {dimension_numbers = #tpu.dot_dimension_numbers<[1], [0], [0], [1], [0, 0, 1, 1], [], []>} : vector<8x32xbf16>, vector<32x128xbf16>, vector<8x128xf32> -> vector<8x128xf32>
    %90 = vector.extract_strided_slice %0 {offsets = [8, 0], sizes = [1, 128], strides = [1, 1]} : vector<16x128xf32> to vector<1x128xf32>
    %91 = vector.broadcast %90 : vector<1x128xf32> to vector<8x128xf32>
    %92 = arith.addf %89, %91 : vector<8x128xf32>
    %93 = vector.extract_strided_slice %84 {offsets = [0, 0], sizes = [8, 32], strides = [1, 1]} : vector<8x128xf32> to vector<8x32xf32>
    %94 = arith.truncf %93 : vector<8x32xf32> to vector<8x32xbf16>
    %c10 = arith.constant 10 : index
    %c0_41 = arith.constant 0 : index
    %c0_42 = arith.constant 0 : index
    %95 = vector.load %arg3[%c10, %c0_41, %c0_42] : memref<15x32x128xbf16, #tpu.memory_space<vmem>>, vector<1x32x128xbf16>
    %96 = vector.shape_cast %95 : vector<1x32x128xbf16> to vector<32x128xbf16>
    %cst_43 = arith.constant dense<0.000000e+00> : vector<8x128xf32>
    %97 = tpu.matmul %94, %96, %cst_43 {dimension_numbers = #tpu.dot_dimension_numbers<[1], [0], [0], [1], [0, 0, 1, 1], [], []>} : vector<8x32xbf16>, vector<32x128xbf16>, vector<8x128xf32> -> vector<8x128xf32>
    %98 = vector.extract_strided_slice %0 {offsets = [9, 0], sizes = [1, 128], strides = [1, 1]} : vector<16x128xf32> to vector<1x128xf32>
    %99 = vector.broadcast %98 : vector<1x128xf32> to vector<8x128xf32>
    %100 = arith.addf %97, %99 : vector<8x128xf32>
    %c0_44 = arith.constant 0 : index
    %c0_45 = arith.constant 0 : index
    %101 = vector.load %arg2[%c0_44, %c0_45] : memref<8x128xf32, #tpu.memory_space<vmem>>, vector<8x128xf32>
    %cst_46 = arith.constant 5.000000e-01 : f32
    %102 = vector.broadcast %cst_46 : f32 to vector<8x128xf32>
    %103 = arith.mulf %100, %102 : vector<8x128xf32>
    %104 = math.exp %103 : vector<8x128xf32>
    %105 = arith.mulf %101, %104 : vector<8x128xf32>
    %106 = arith.addf %105, %92 : vector<8x128xf32>
    %107 = vector.extract_strided_slice %29 {offsets = [0, 0], sizes = [8, 32], strides = [1, 1]} : vector<8x128xf32> to vector<8x32xf32>
    %108 = arith.truncf %107 : vector<8x32xf32> to vector<8x32xbf16>
    %c11 = arith.constant 11 : index
    %c0_47 = arith.constant 0 : index
    %c0_48 = arith.constant 0 : index
    %109 = vector.load %arg3[%c11, %c0_47, %c0_48] : memref<15x32x128xbf16, #tpu.memory_space<vmem>>, vector<1x32x128xbf16>
    %110 = vector.shape_cast %109 : vector<1x32x128xbf16> to vector<32x128xbf16>
    %cst_49 = arith.constant dense<0.000000e+00> : vector<8x128xf32>
    %111 = tpu.matmul %108, %110, %cst_49 {dimension_numbers = #tpu.dot_dimension_numbers<[1], [0], [0], [1], [0, 0, 1, 1], [], []>} : vector<8x32xbf16>, vector<32x128xbf16>, vector<8x128xf32> -> vector<8x128xf32>
    %112 = vector.extract_strided_slice %106 {offsets = [0, 0], sizes = [8, 32], strides = [1, 1]} : vector<8x128xf32> to vector<8x32xf32>
    %113 = arith.truncf %112 : vector<8x32xf32> to vector<8x32xbf16>
    %c12 = arith.constant 12 : index
    %c0_50 = arith.constant 0 : index
    %c0_51 = arith.constant 0 : index
    %114 = vector.load %arg3[%c12, %c0_50, %c0_51] : memref<15x32x128xbf16, #tpu.memory_space<vmem>>, vector<1x32x128xbf16>
    %115 = vector.shape_cast %114 : vector<1x32x128xbf16> to vector<32x128xbf16>
    %cst_52 = arith.constant dense<0.000000e+00> : vector<8x128xf32>
    %116 = tpu.matmul %113, %115, %cst_52 {dimension_numbers = #tpu.dot_dimension_numbers<[1], [0], [0], [1], [0, 0, 1, 1], [], []>} : vector<8x32xbf16>, vector<32x128xbf16>, vector<8x128xf32> -> vector<8x128xf32>
    %117 = arith.addf %111, %116 : vector<8x128xf32>
    %118 = vector.extract_strided_slice %0 {offsets = [10, 0], sizes = [1, 128], strides = [1, 1]} : vector<16x128xf32> to vector<1x128xf32>
    %119 = vector.broadcast %118 : vector<1x128xf32> to vector<8x128xf32>
    %120 = arith.addf %117, %119 : vector<8x128xf32>
    %cst_53 = arith.constant 0.000000e+00 : f32
    %121 = vector.broadcast %cst_53 : f32 to vector<8x128xf32>
    %122 = arith.maximumf %120, %121 : vector<8x128xf32>
    %123 = vector.extract_strided_slice %122 {offsets = [0, 0], sizes = [8, 32], strides = [1, 1]} : vector<8x128xf32> to vector<8x32xf32>
    %124 = arith.truncf %123 : vector<8x32xf32> to vector<8x32xbf16>
    %c13 = arith.constant 13 : index
    %c0_54 = arith.constant 0 : index
    %c0_55 = arith.constant 0 : index
    %125 = vector.load %arg3[%c13, %c0_54, %c0_55] : memref<15x32x128xbf16, #tpu.memory_space<vmem>>, vector<1x32x128xbf16>
    %126 = vector.shape_cast %125 : vector<1x32x128xbf16> to vector<32x128xbf16>
    %cst_56 = arith.constant dense<0.000000e+00> : vector<8x128xf32>
    %127 = tpu.matmul %124, %126, %cst_56 {dimension_numbers = #tpu.dot_dimension_numbers<[1], [0], [0], [1], [0, 0, 1, 1], [], []>} : vector<8x32xbf16>, vector<32x128xbf16>, vector<8x128xf32> -> vector<8x128xf32>
    %128 = vector.extract_strided_slice %0 {offsets = [11, 0], sizes = [1, 128], strides = [1, 1]} : vector<16x128xf32> to vector<1x128xf32>
    %129 = vector.broadcast %128 : vector<1x128xf32> to vector<8x128xf32>
    %130 = arith.addf %127, %129 : vector<8x128xf32>
    %cst_57 = arith.constant 0.000000e+00 : f32
    %131 = vector.broadcast %cst_57 : f32 to vector<8x128xf32>
    %132 = arith.maximumf %130, %131 : vector<8x128xf32>
    %133 = vector.extract_strided_slice %132 {offsets = [0, 0], sizes = [8, 32], strides = [1, 1]} : vector<8x128xf32> to vector<8x32xf32>
    %134 = arith.truncf %133 : vector<8x32xf32> to vector<8x32xbf16>
    %c14 = arith.constant 14 : index
    %c0_58 = arith.constant 0 : index
    %c0_59 = arith.constant 0 : index
    %135 = vector.load %arg3[%c14, %c0_58, %c0_59] : memref<15x32x128xbf16, #tpu.memory_space<vmem>>, vector<1x32x128xbf16>
    %136 = vector.shape_cast %135 : vector<1x32x128xbf16> to vector<32x128xbf16>
    %cst_60 = arith.constant dense<0.000000e+00> : vector<8x128xf32>
    %137 = tpu.matmul %134, %136, %cst_60 {dimension_numbers = #tpu.dot_dimension_numbers<[1], [0], [0], [1], [0, 0, 1, 1], [], []>} : vector<8x32xbf16>, vector<32x128xbf16>, vector<8x128xf32> -> vector<8x128xf32>
    %138 = vector.extract_strided_slice %0 {offsets = [12, 0], sizes = [1, 128], strides = [1, 1]} : vector<16x128xf32> to vector<1x128xf32>
    %139 = vector.broadcast %138 : vector<1x128xf32> to vector<8x128xf32>
    %140 = arith.addf %137, %139 : vector<8x128xf32>
    %c0_61 = arith.constant 0 : index
    %c0_62 = arith.constant 0 : index
    %c0_63 = arith.constant 0 : index
    %141 = vector.load %arg5[%c0_61, %c0_62, %c0_63] : memref<3x8x128xf32, #tpu.memory_space<vmem>>, vector<1x8x128xf32>
    %142 = vector.shape_cast %141 : vector<1x8x128xf32> to vector<8x128xf32>
    %143 = vector.shape_cast %140 : vector<8x128xf32> to vector<1x8x128xf32>
    tpu.vector_store %arg5[%c0_61, %c0_62, %c0_63], %143 {strides = array<i32>} : memref<3x8x128xf32, #tpu.memory_space<vmem>>, vector<1x8x128xf32>,
    %c1_64 = arith.constant 1 : index
    %c0_65 = arith.constant 0 : index
    %c0_66 = arith.constant 0 : index
    %144 = vector.load %arg5[%c1_64, %c0_65, %c0_66] : memref<3x8x128xf32, #tpu.memory_space<vmem>>, vector<1x8x128xf32>
    %145 = vector.shape_cast %144 : vector<1x8x128xf32> to vector<8x128xf32>
    %146 = vector.shape_cast %92 : vector<8x128xf32> to vector<1x8x128xf32>
    tpu.vector_store %arg5[%c1_64, %c0_65, %c0_66], %146 {strides = array<i32>} : memref<3x8x128xf32, #tpu.memory_space<vmem>>, vector<1x8x128xf32>,
    %c2_67 = arith.constant 2 : index
    %c0_68 = arith.constant 0 : index
    %c0_69 = arith.constant 0 : index
    %147 = vector.load %arg5[%c2_67, %c0_68, %c0_69] : memref<3x8x128xf32, #tpu.memory_space<vmem>>, vector<1x8x128xf32>
    %148 = vector.shape_cast %147 : vector<1x8x128xf32> to vector<8x128xf32>
    %149 = vector.shape_cast %100 : vector<8x128xf32> to vector<1x8x128xf32>
    tpu.vector_store %arg5[%c2_67, %c0_68, %c0_69], %149 {strides = array<i32>} : memref<3x8x128xf32, #tpu.memory_space<vmem>>, vector<1x8x128xf32>,
    return
  }
}

</mosaic_0001>

<llo_original>
// kernel: cvae_forward_train.1
$region0: #{cvae_forward_train.1}
  #allocation0 [shape = 'u32[]', space=smem, size = 0x4, offset = 0x4, fixed_abs, tag = 'smem constant byte address 0x4 - core index']
  #allocation1 [shape = 'u32[144,128]{1,0:T(1,128)}', space=vmem, size = 0x12000, scoped, tag = 'internal scratch']
  %s0 = inlined_call_operand.vmem [shape: f32[8,128], index: 0, kind: input, shape index: {}]
  %s1 = inlined_call_operand.vmem [shape: f32[8,128], index: 1, kind: input, shape index: {}]
  %s2 = inlined_call_operand.vmem [shape: f32[8,128], index: 2, kind: input, shape index: {}]
  %s3 = inlined_call_operand.hbm [shape: bf16[15,32,128], index: 3, kind: input, shape index: {}]
  %s4 = inlined_call_operand.vmem [shape: f32[16,128], index: 4, kind: input, shape index: {}]
  %s5 = inlined_call_operand.vmem [shape: f32[3,8,128], index: 5, kind: output, shape index: {}]
  %s6 = sld [smem:[#allocation0]]
  $region34: #{cvae_forward_train.1} parent=0
    _
  %s8 = ssub.s32 1, %s6
  %s9 = scalar_select 0, %s8, %s6
  $region1: #{cvae_forward_train.1} parent=0
    #allocation2 [shape = 'u8[122880]{0}', space=vmem, size = 0x1e000, scoped, tag = 'input window, operand 3, single buffered']
    #allocation3 [shape = 's32[1]{0}', space=sflag, size = 0x4, scoped, tag = 'scoped memory for cvae_forward_train.1']
    %10 = vsyncpa [#allocation3], 0
    // Predicated region
    $region2: #{cvae_forward_train.1} parent=1 // pred_check
      _
    $region3: #{cvae_forward_train.1} parent=1 // pred_check_branch
      %12 = sbr.rel (0) target = $region5
    $region4: #{cvae_forward_train.1} parent=1 // pred_region
      _
    $region5: #{cvae_forward_train.1} parent=1 // pred_fallthru
      _
    // Predicated region
    $region6: #{cvae_forward_train.1} parent=1 // pred_check
      _
    $region7: #{cvae_forward_train.1} parent=1 // pred_check_branch
      %14 = sbr.rel (0) target = $region9
    $region8: #{cvae_forward_train.1} parent=1 // pred_region
      _
    $region9: #{cvae_forward_train.1} parent=1 // pred_fallthru
      _
    // Predicated region
    $region10: #{cvae_forward_train.1} parent=1 // pred_check
      _
    $region11: #{cvae_forward_train.1} parent=1 // pred_check_branch
      %16 = sbr.rel (0) target = $region13
    $region12: #{cvae_forward_train.1} parent=1 // pred_region
      _
    $region13: #{cvae_forward_train.1} parent=1 // pred_fallthru
      _
    // Predicated region
    $region14: #{cvae_forward_train.1} parent=1 // pred_check
      _
    $region15: #{cvae_forward_train.1} parent=1 // pred_check_branch
      %18 = sbr.rel (0) target = $region17
    $region16: #{cvae_forward_train.1} parent=1 // pred_region
      %s20 = ssub.s32 3840, 3840
      %21 = vsyncadd [#allocation3], %s20
      %s22 = sshll.u32 [#allocation2], 4
      %s23 = int_to_ptr.vmem [resolvable:$true] %s22
      %28 = dma.hbm_to_vmem [thread:$0]  %s3, 3840, %s23, [#allocation3], 64, 64, 4
    $region17: #{cvae_forward_train.1} parent=1 // pred_fallthru
      _
    // Predicated region
    $region18: #{cvae_forward_train.1} parent=1 // pred_check
      _
    $region19: #{cvae_forward_train.1} parent=1 // pred_check_branch
      %30 = sbr.rel (0) target = $region21
    $region20: #{cvae_forward_train.1} parent=1 // pred_region
      _
    $region21: #{cvae_forward_train.1} parent=1 // pred_fallthru
      _
    // Predicated region
    $region22: #{cvae_forward_train.1} parent=1 // pred_check
      _
    $region23: #{cvae_forward_train.1} parent=1 // pred_check_branch
      %32 = sbr.rel (0) target = $region25
    $region24: #{cvae_forward_train.1} parent=1 // pred_region
      %33 = dma.done [#allocation3], 3840
    $region25: #{cvae_forward_train.1} parent=1 // pred_fallthru
      _
    %v35 = vld [vmem:[%s4] sm:$0xff]
    %v36 = vld [vmem:[%s4 + $0x8] sm:$0xff]
    %v37 = vld [vmem:[%s0] sm:$0xff]
    %v38 = vpack.c.bf16 %v37, %v37
    %v39 = vld [vmem:[#allocation2] sm:$0xf]
    %v40 = vld [vmem:[#allocation2 + $0x4] sm:$0xf]
    %v41 = vld [vmem:[#allocation2 + $0x8] sm:$0xf]
    %v42 = vld [vmem:[#allocation2 + $0xc] sm:$0xf]
    %v43 = vlaneseq
    %v44 = vshrl.u32 %v43, 7
    %v45 = vsub.s32 0, %v44
    %v46 = vrot.slane %v35, %v45
    %v51 = vunpack.c.l.b16 %v39
    %v52 = vunpack.c.l.b16 %v40
    %v53 = vunpack.c.l.b16 %v41
    %v54 = vunpack.c.l.b16 %v42
    %v55 = vpack.c.b16 %v52, %v51
    %v56 = vpack.c.b16 %v54, %v53
    %vm59 = vcmask 261120
    %v61 = vsel %vm59, %v38, 0
    %63 = vmatprep.subr.bf16.mxu0 0
    %64 = vmatpush1.bf16.msra.mxu0 %v55
    %65 = vmatprep.subr.bf16.mxu0 0
    %66 = vmatpush1.bf16.msra.mxu0 %v56
    %67 = vmatprep.subr.bf16.mxu0 0
    %68 = vmatpush1.bf16.msra.mxu0 0
    %69 = vmatprep.subr.bf16.mxu0 0
    %70 = vmatpush1.bf16.msra.mxu0 0
    %71 = vmatprep.subr.bf16.mxu0 0
    %72 = vmatpush1.bf16.msra.mxu0 0
    %73 = vmatprep.subr.bf16.mxu0 0
    %74 = vmatpush1.bf16.msra.mxu0 0
    %75 = vmatprep.subr.bf16.mxu0 0
    %76 = vmatpush1.bf16.msra.mxu0 0
    %77 = vmatprep.subr.bf16.mxu0 0
    %78 = vmatpush1.bf16.msra.mxu0 0
    %79 = vmatprep.subr.bf16.mxu0 0
    %80 = vmatpush1.bf16.msra.mxu0 0
    %81 = vmatprep.subr.bf16.mxu0 0
    %82 = vmatpush1.bf16.msra.mxu0 0
    %83 = vmatprep.subr.bf16.mxu0 0
    %84 = vmatpush1.bf16.msra.mxu0 0
    %85 = vmatprep.subr.bf16.mxu0 0
    %86 = vmatpush1.bf16.msra.mxu0 0
    %87 = vmatprep.subr.bf16.mxu0 0
    %88 = vmatpush1.bf16.msra.mxu0 0
    %89 = vmatprep.subr.bf16.mxu0 0
    %90 = vmatpush1.bf16.msra.mxu0 0
    %91 = vmatprep.subr.bf16.mxu0 0
    %92 = vmatpush1.bf16.msra.mxu0 0
    %93 = vmatprep.subr.bf16.mxu0 0
    %94 = vmatpush1.bf16.msra.mxu0 0
    %95 = vmatprep.mubr.bf16.mxu0 0
    %96 = vmatmul.mubr.bf16.gmra.mrb[0].mxu0 %v61
    %v97 = vpop.f32.mrb[0].mxu0
    %v98 = vadd.f32 %v46, %v97
    %v99 = vpop.f32.mrb[0].mxu0
    %v100 = vpop.f32.mrb[0].mxu0
    %v101 = vpop.f32.mrb[0].mxu0
    %102 = vdwg.mxu0
    %v103 = vmax.f32 %v98, 0.0
    %v104 = vpack.c.bf16 %v103, %v103
    %s105 = scalar_lea.vmem [#allocation2], 16
    %v106 = vld [vmem:[%s105] sm:$0xf]
    %v107 = vld [vmem:[%s105 + $0x4] sm:$0xf]
    %v108 = vld [vmem:[%s105 + $0x8] sm:$0xf]
    %v109 = vld [vmem:[%s105 + $0xc] sm:$0xf]
    %v110 = vlaneseq
    %v111 = vshrl.u32 %v110, 7
    %v112 = vsub.s32 1, %v111
    %v113 = vrot.slane %v35, %v112
    %v118 = vunpack.c.l.b16 %v106
    %v119 = vunpack.c.l.b16 %v107
    %v120 = vunpack.c.l.b16 %v108
    %v121 = vunpack.c.l.b16 %v109
    %v122 = vpack.c.b16 %v119, %v118
    %v123 = vpack.c.b16 %v121, %v120
    %v127 = vsel %vm59, %v104, 0
    %129 = vmatprep.subr.bf16.mxu0 0
    %130 = vmatpush1.bf16.msra.mxu0 %v122
    %131 = vmatprep.subr.bf16.mxu0 0
    %132 = vmatpush1.bf16.msra.mxu0 %v123
    %133 = vmatprep.subr.bf16.mxu0 0
    %134 = vmatpush1.bf16.msra.mxu0 0
    %135 = vmatprep.subr.bf16.mxu0 0
    %136 = vmatpush1.bf16.msra.mxu0 0
    %137 = vmatprep.subr.bf16.mxu0 0
    %138 = vmatpush1.bf16.msra.mxu0 0
    %139 = vmatprep.subr.bf16.mxu0 0
    %140 = vmatpush1.bf16.msra.mxu0 0
    %141 = vmatprep.subr.bf16.mxu0 0
    %142 = vmatpush1.bf16.msra.mxu0 0
    %143 = vmatprep.subr.bf16.mxu0 0
    %144 = vmatpush1.bf16.msra.mxu0 0
    %145 = vmatprep.subr.bf16.mxu0 0
    %146 = vmatpush1.bf16.msra.mxu0 0
    %147 = vmatprep.subr.bf16.mxu0 0
    %148 = vmatpush1.bf16.msra.mxu0 0
    %149 = vmatprep.subr.bf16.mxu0 0
    %150 = vmatpush1.bf16.msra.mxu0 0
    %151 = vmatprep.subr.bf16.mxu0 0
    %152 = vmatpush1.bf16.msra.mxu0 0
    %153 = vmatprep.subr.bf16.mxu0 0
    %154 = vmatpush1.bf16.msra.mxu0 0
    %155 = vmatprep.subr.bf16.mxu0 0
    %156 = vmatpush1.bf16.msra.mxu0 0
    %157 = vmatprep.subr.bf16.mxu0 0
    %158 = vmatpush1.bf16.msra.mxu0 0
    %159 = vmatprep.subr.bf16.mxu0 0
    %160 = vmatpush1.bf16.msra.mxu0 0
    %161 = vmatprep.mubr.bf16.mxu0 0
    %162 = vmatmul.mubr.bf16.gmra.mrb[0].mxu0 %v127
    %v163 = vpop.f32.mrb[0].mxu0
    %v164 = vadd.f32 %v113, %v163
    %v165 = vpop.f32.mrb[0].mxu0
    %v166 = vpop.f32.mrb[0].mxu0
    %v167 = vpop.f32.mrb[0].mxu0
    %168 = vdwg.mxu0
    %v169 = vmax.f32 %v164, 0.0
    %v170 = vpack.c.bf16 %v169, %v169
    %s171 = scalar_lea.vmem [#allocation2], 32
    %v172 = vld [vmem:[%s171] sm:$0xf]
    %v173 = vld [vmem:[%s171 + $0x4] sm:$0xf]
    %v174 = vld [vmem:[%s171 + $0x8] sm:$0xf]
    %v175 = vld [vmem:[%s171 + $0xc] sm:$0xf]
    %v176 = vlaneseq
    %v177 = vshrl.u32 %v176, 7
    %v178 = vsub.s32 2, %v177
    %v179 = vrot.slane %v35, %v178
    %v184 = vunpack.c.l.b16 %v172
    %v185 = vunpack.c.l.b16 %v173
    %v186 = vunpack.c.l.b16 %v174
    %v187 = vunpack.c.l.b16 %v175
    %v188 = vpack.c.b16 %v185, %v184
    %v189 = vpack.c.b16 %v187, %v186
    %v193 = vsel %vm59, %v170, 0
    %195 = vmatprep.subr.bf16.mxu0 0
    %196 = vmatpush1.bf16.msra.mxu0 %v188
    %197 = vmatprep.subr.bf16.mxu0 0
    %198 = vmatpush1.bf16.msra.mxu0 %v189
    %199 = vmatprep.subr.bf16.mxu0 0
    %200 = vmatpush1.bf16.msra.mxu0 0
    %201 = vmatprep.subr.bf16.mxu0 0
    %202 = vmatpush1.bf16.msra.mxu0 0
    %203 = vmatprep.subr.bf16.mxu0 0
    %204 = vmatpush1.bf16.msra.mxu0 0
    %205 = vmatprep.subr.bf16.mxu0 0
    %206 = vmatpush1.bf16.msra.mxu0 0
    %207 = vmatprep.subr.bf16.mxu0 0
    %208 = vmatpush1.bf16.msra.mxu0 0
    %209 = vmatprep.subr.bf16.mxu0 0
    %210 = vmatpush1.bf16.msra.mxu0 0
    %211 = vmatprep.subr.bf16.mxu0 0
    %212 = vmatpush1.bf16.msra.mxu0 0
    %213 = vmatprep.subr.bf16.mxu0 0
    %214 = vmatpush1.bf16.msra.mxu0 0
    %215 = vmatprep.subr.bf16.mxu0 0
    %216 = vmatpush1.bf16.msra.mxu0 0
    %217 = vmatprep.subr.bf16.mxu0 0
    %218 = vmatpush1.bf16.msra.mxu0 0
    %219 = vmatprep.subr.bf16.mxu0 0
    %220 = vmatpush1.bf16.msra.mxu0 0
    %221 = vmatprep.subr.bf16.mxu0 0
    %222 = vmatpush1.bf16.msra.mxu0 0
    %223 = vmatprep.subr.bf16.mxu0 0
    %224 = vmatpush1.bf16.msra.mxu0 0
    %225 = vmatprep.subr.bf16.mxu0 0
    %226 = vmatpush1.bf16.msra.mxu0 0
    %227 = vmatprep.mubr.bf16.mxu0 0
    %228 = vmatmul.mubr.bf16.gmra.mrb[0].mxu0 %v193
    %v229 = vpop.f32.mrb[0].mxu0
    %v230 = vadd.f32 %v179, %v229
    %v231 = vpop.f32.mrb[0].mxu0
    %v232 = vpop.f32.mrb[0].mxu0
    %v233 = vpop.f32.mrb[0].mxu0
    %234 = vdwg.mxu0
    %v235 = vld [vmem:[%s1] sm:$0xff]
    %v236 = vpack.c.bf16 %v235, %v235
    %s237 = scalar_lea.vmem [#allocation2], 48
    %v238 = vld [vmem:[%s237] sm:$0xf]
    %v239 = vld [vmem:[%s237 + $0x4] sm:$0xf]
    %v240 = vld [vmem:[%s237 + $0x8] sm:$0xf]
    %v241 = vld [vmem:[%s237 + $0xc] sm:$0xf]
    %v242 = vlaneseq
    %v243 = vshrl.u32 %v242, 7
    %v244 = vsub.s32 3, %v243
    %v245 = vrot.slane %v35, %v244
    %v250 = vunpack.c.l.b16 %v238
    %v251 = vunpack.c.l.b16 %v239
    %v252 = vunpack.c.l.b16 %v240
    %v253 = vunpack.c.l.b16 %v241
    %v254 = vpack.c.b16 %v251, %v250
    %v255 = vpack.c.b16 %v253, %v252
    %v259 = vsel %vm59, %v236, 0
    %261 = vmatprep.subr.bf16.mxu0 0
    %262 = vmatpush1.bf16.msra.mxu0 %v254
    %263 = vmatprep.subr.bf16.mxu0 0
    %264 = vmatpush1.bf16.msra.mxu0 %v255
    %265 = vmatprep.subr.bf16.mxu0 0
    %266 = vmatpush1.bf16.msra.mxu0 0
    %267 = vmatprep.subr.bf16.mxu0 0
    %268 = vmatpush1.bf16.msra.mxu0 0
    %269 = vmatprep.subr.bf16.mxu0 0
    %270 = vmatpush1.bf16.msra.mxu0 0
    %271 = vmatprep.subr.bf16.mxu0 0
    %272 = vmatpush1.bf16.msra.mxu0 0
    %273 = vmatprep.subr.bf16.mxu0 0
    %274 = vmatpush1.bf16.msra.mxu0 0
    %275 = vmatprep.subr.bf16.mxu0 0
    %276 = vmatpush1.bf16.msra.mxu0 0
    %277 = vmatprep.subr.bf16.mxu0 0
    %278 = vmatpush1.bf16.msra.mxu0 0
    %279 = vmatprep.subr.bf16.mxu0 0
    %280 = vmatpush1.bf16.msra.mxu0 0
    %281 = vmatprep.subr.bf16.mxu0 0
    %282 = vmatpush1.bf16.msra.mxu0 0
    %283 = vmatprep.subr.bf16.mxu0 0
    %284 = vmatpush1.bf16.msra.mxu0 0
    %285 = vmatprep.subr.bf16.mxu0 0
    %286 = vmatpush1.bf16.msra.mxu0 0
    %287 = vmatprep.subr.bf16.mxu0 0
    %288 = vmatpush1.bf16.msra.mxu0 0
    %289 = vmatprep.subr.bf16.mxu0 0
    %290 = vmatpush1.bf16.msra.mxu0 0
    %291 = vmatprep.subr.bf16.mxu0 0
    %292 = vmatpush1.bf16.msra.mxu0 0
    %293 = vmatprep.mubr.bf16.mxu0 0
    %294 = vmatmul.mubr.bf16.gmra.mrb[0].mxu0 %v259
    %v295 = vpop.f32.mrb[0].mxu0
    %v296 = vadd.f32 %v245, %v295
    %v297 = vpop.f32.mrb[0].mxu0
    %v298 = vpop.f32.mrb[0].mxu0
    %v299 = vpop.f32.mrb[0].mxu0
    %300 = vdwg.mxu0
    %v301 = vmax.f32 %v296, 0.0
    %v302 = vpack.c.bf16 %v301, %v301
    %s303 = scalar_lea.vmem [#allocation2], 64
    %v304 = vld [vmem:[%s303] sm:$0xf]
    %v305 = vld [vmem:[%s303 + $0x4] sm:$0xf]
    %v306 = vld [vmem:[%s303 + $0x8] sm:$0xf]
    %v307 = vld [vmem:[%s303 + $0xc] sm:$0xf]
    %v308 = vlaneseq
    %v309 = vshrl.u32 %v308, 7
    %v310 = vsub.s32 4, %v309
    %v311 = vrot.slane %v35, %v310
    %v316 = vunpack.c.l.b16 %v304
    %v317 = vunpack.c.l.b16 %v305
    %v318 = vunpack.c.l.b16 %v306
    %v319 = vunpack.c.l.b16 %v307
    %v320 = vpack.c.b16 %v317, %v316
    %v321 = vpack.c.b16 %v319, %v318
    %v325 = vsel %vm59, %v302, 0
    %327 = vmatprep.subr.bf16.mxu0 0
    %328 = vmatpush1.bf16.msra.mxu0 %v320
    %329 = vmatprep.subr.bf16.mxu0 0
    %330 = vmatpush1.bf16.msra.mxu0 %v321
    %331 = vmatprep.subr.bf16.mxu0 0
    %332 = vmatpush1.bf16.msra.mxu0 0
    %333 = vmatprep.subr.bf16.mxu0 0
    %334 = vmatpush1.bf16.msra.mxu0 0
    %335 = vmatprep.subr.bf16.mxu0 0
    %336 = vmatpush1.bf16.msra.mxu0 0
    %337 = vmatprep.subr.bf16.mxu0 0
    %338 = vmatpush1.bf16.msra.mxu0 0
    %339 = vmatprep.subr.bf16.mxu0 0
    %340 = vmatpush1.bf16.msra.mxu0 0
    %341 = vmatprep.subr.bf16.mxu0 0
    %342 = vmatpush1.bf16.msra.mxu0 0
    %343 = vmatprep.subr.bf16.mxu0 0
    %344 = vmatpush1.bf16.msra.mxu0 0
    %345 = vmatprep.subr.bf16.mxu0 0
    %346 = vmatpush1.bf16.msra.mxu0 0
    %347 = vmatprep.subr.bf16.mxu0 0
    %348 = vmatpush1.bf16.msra.mxu0 0
    %349 = vmatprep.subr.bf16.mxu0 0
    %350 = vmatpush1.bf16.msra.mxu0 0
    %351 = vmatprep.subr.bf16.mxu0 0
    %352 = vmatpush1.bf16.msra.mxu0 0
    %353 = vmatprep.subr.bf16.mxu0 0
    %354 = vmatpush1.bf16.msra.mxu0 0
    %355 = vmatprep.subr.bf16.mxu0 0
    %356 = vmatpush1.bf16.msra.mxu0 0
    %357 = vmatprep.subr.bf16.mxu0 0
    %358 = vmatpush1.bf16.msra.mxu0 0
    %359 = vmatprep.mubr.bf16.mxu0 0
    %360 = vmatmul.mubr.bf16.gmra.mrb[0].mxu0 %v325
    %v361 = vpop.f32.mrb[0].mxu0
    %v362 = vadd.f32 %v311, %v361
    %v363 = vpop.f32.mrb[0].mxu0
    %v364 = vpop.f32.mrb[0].mxu0
    %v365 = vpop.f32.mrb[0].mxu0
    %366 = vdwg.mxu0
    %v367 = vmax.f32 %v362, 0.0
    %v368 = vpack.c.bf16 %v367, %v367
    %s369 = scalar_lea.vmem [#allocation2], 80
    %v370 = vld [vmem:[%s369] sm:$0xf]
    %v371 = vld [vmem:[%s369 + $0x4] sm:$0xf]
    %v372 = vld [vmem:[%s369 + $0x8] sm:$0xf]
    %v373 = vld [vmem:[%s369 + $0xc] sm:$0xf]
    %v374 = vlaneseq
    %v375 = vshrl.u32 %v374, 7
    %v376 = vsub.s32 5, %v375
    %v377 = vrot.slane %v35, %v376
    %v382 = vunpack.c.l.b16 %v370
    %v383 = vunpack.c.l.b16 %v371
    %v384 = vunpack.c.l.b16 %v372
    %v385 = vunpack.c.l.b16 %v373
    %v386 = vpack.c.b16 %v383, %v382
    %v387 = vpack.c.b16 %v385, %v384
    %v391 = vsel %vm59, %v368, 0
    %393 = vmatprep.subr.bf16.mxu0 0
    %394 = vmatpush1.bf16.msra.mxu0 %v386
    %395 = vmatprep.subr.bf16.mxu0 0
    %396 = vmatpush1.bf16.msra.mxu0 %v387
    %397 = vmatprep.subr.bf16.mxu0 0
    %398 = vmatpush1.bf16.msra.mxu0 0
    %399 = vmatprep.subr.bf16.mxu0 0
    %400 = vmatpush1.bf16.msra.mxu0 0
    %401 = vmatprep.subr.bf16.mxu0 0
    %402 = vmatpush1.bf16.msra.mxu0 0
    %403 = vmatprep.subr.bf16.mxu0 0
    %404 = vmatpush1.bf16.msra.mxu0 0
    %405 = vmatprep.subr.bf16.mxu0 0
    %406 = vmatpush1.bf16.msra.mxu0 0
    %407 = vmatprep.subr.bf16.mxu0 0
    %408 = vmatpush1.bf16.msra.mxu0 0
    %409 = vmatprep.subr.bf16.mxu0 0
    %410 = vmatpush1.bf16.msra.mxu0 0
    %411 = vmatprep.subr.bf16.mxu0 0
    %412 = vmatpush1.bf16.msra.mxu0 0
    %413 = vmatprep.subr.bf16.mxu0 0
    %414 = vmatpush1.bf16.msra.mxu0 0
    %415 = vmatprep.subr.bf16.mxu0 0
    %416 = vmatpush1.bf16.msra.mxu0 0
    %417 = vmatprep.subr.bf16.mxu0 0
    %418 = vmatpush1.bf16.msra.mxu0 0
    %419 = vmatprep.subr.bf16.mxu0 0
    %420 = vmatpush1.bf16.msra.mxu0 0
    %421 = vmatprep.subr.bf16.mxu0 0
    %422 = vmatpush1.bf16.msra.mxu0 0
    %423 = vmatprep.subr.bf16.mxu0 0
    %424 = vmatpush1.bf16.msra.mxu0 0
    %425 = vmatprep.mubr.bf16.mxu0 0
    %426 = vmatmul.mubr.bf16.gmra.mrb[0].mxu0 %v391
    %v427 = vpop.f32.mrb[0].mxu0
    %v428 = vadd.f32 %v377, %v427
    %v429 = vpop.f32.mrb[0].mxu0
    %v430 = vpop.f32.mrb[0].mxu0
    %v431 = vpop.f32.mrb[0].mxu0
    %432 = vdwg.mxu0
    %v433 = vpack.c.bf16 %v230, %v230
    %s434 = scalar_lea.vmem [#allocation2], 96
    %v435 = vld [vmem:[%s434] sm:$0xf]
    %v436 = vld [vmem:[%s434 + $0x4] sm:$0xf]
    %v437 = vld [vmem:[%s434 + $0x8] sm:$0xf]
    %v438 = vld [vmem:[%s434 + $0xc] sm:$0xf]
    %v439 = vpack.c.bf16 %v428, %v428
    %s440 = scalar_lea.vmem [#allocation2], 112
    %v441 = vld [vmem:[%s440] sm:$0xf]
    %v442 = vld [vmem:[%s440 + $0x4] sm:$0xf]
    %v443 = vld [vmem:[%s440 + $0x8] sm:$0xf]
    %v444 = vld [vmem:[%s440 + $0xc] sm:$0xf]
    %v449 = vunpack.c.l.b16 %v441
    %v450 = vunpack.c.l.b16 %v442
    %v451 = vunpack.c.l.b16 %v443
    %v452 = vunpack.c.l.b16 %v444
    %v453 = vpack.c.b16 %v450, %v449
    %v454 = vpack.c.b16 %v452, %v451
    %v458 = vsel %vm59, %v439, 0
    %460 = vmatprep.subr.bf16.mxu0 0
    %461 = vmatpush1.bf16.msra.mxu0 %v453
    %462 = vmatprep.subr.bf16.mxu0 0
    %463 = vmatpush1.bf16.msra.mxu0 %v454
    %464 = vmatprep.subr.bf16.mxu0 0
    %465 = vmatpush1.bf16.msra.mxu0 0
    %466 = vmatprep.subr.bf16.mxu0 0
    %467 = vmatpush1.bf16.msra.mxu0 0
    %468 = vmatprep.subr.bf16.mxu0 0
    %469 = vmatpush1.bf16.msra.mxu0 0
    %470 = vmatprep.subr.bf16.mxu0 0
    %471 = vmatpush1.bf16.msra.mxu0 0
    %472 = vmatprep.subr.bf16.mxu0 0
    %473 = vmatpush1.bf16.msra.mxu0 0
    %474 = vmatprep.subr.bf16.mxu0 0
    %475 = vmatpush1.bf16.msra.mxu0 0
    %476 = vmatprep.subr.bf16.mxu0 0
    %477 = vmatpush1.bf16.msra.mxu0 0
    %478 = vmatprep.subr.bf16.mxu0 0
    %479 = vmatpush1.bf16.msra.mxu0 0
    %480 = vmatprep.subr.bf16.mxu0 0
    %481 = vmatpush1.bf16.msra.mxu0 0
    %482 = vmatprep.subr.bf16.mxu0 0
    %483 = vmatpush1.bf16.msra.mxu0 0
    %484 = vmatprep.subr.bf16.mxu0 0
    %485 = vmatpush1.bf16.msra.mxu0 0
    %486 = vmatprep.subr.bf16.mxu0 0
    %487 = vmatpush1.bf16.msra.mxu0 0
    %488 = vmatprep.subr.bf16.mxu0 0
    %489 = vmatpush1.bf16.msra.mxu0 0
    %490 = vmatprep.subr.bf16.mxu0 0
    %491 = vmatpush1.bf16.msra.mxu0 0
    %492 = vmatprep.mubr.bf16.mxu0 0
    %493 = vmatmul.mubr.bf16.gmra.mrb[0].mxu0 %v458
    %v494 = vpop.f32.mrb[0].mxu0
    %v495 = vadd.f32 0.0, %v494
    %v496 = vpop.f32.mrb[0].mxu0
    %v497 = vpop.f32.mrb[0].mxu0
    %v498 = vpop.f32.mrb[0].mxu0
    %499 = vdwg.mxu0
    %v504 = vunpack.c.l.b16 %v435
    %v505 = vunpack.c.l.b16 %v436
    %v506 = vunpack.c.l.b16 %v437
    %v507 = vunpack.c.l.b16 %v438
    %v508 = vpack.c.b16 %v505, %v504
    %v509 = vpack.c.b16 %v507, %v506
    %v513 = vsel %vm59, %v433, 0
    %515 = vmatprep.subr.bf16.mxu0 0
    %516 = vmatpush1.bf16.msra.mxu0 %v508
    %517 = vmatprep.subr.bf16.mxu0 0
    %518 = vmatpush1.bf16.msra.mxu0 %v509
    %519 = vmatprep.subr.bf16.mxu0 0
    %520 = vmatpush1.bf16.msra.mxu0 0
    %521 = vmatprep.subr.bf16.mxu0 0
    %522 = vmatpush1.bf16.msra.mxu0 0
    %523 = vmatprep.subr.bf16.mxu0 0
    %524 = vmatpush1.bf16.msra.mxu0 0
    %525 = vmatprep.subr.bf16.mxu0 0
    %526 = vmatpush1.bf16.msra.mxu0 0
    %527 = vmatprep.subr.bf16.mxu0 0
    %528 = vmatpush1.bf16.msra.mxu0 0
    %529 = vmatprep.subr.bf16.mxu0 0
    %530 = vmatpush1.bf16.msra.mxu0 0
    %531 = vmatprep.subr.bf16.mxu0 0
    %532 = vmatpush1.bf16.msra.mxu0 0
    %533 = vmatprep.subr.bf16.mxu0 0
    %534 = vmatpush1.bf16.msra.mxu0 0
    %535 = vmatprep.subr.bf16.mxu0 0
    %536 = vmatpush1.bf16.msra.mxu0 0
    %537 = vmatprep.subr.bf16.mxu0 0
    %538 = vmatpush1.bf16.msra.mxu0 0
    %539 = vmatprep.subr.bf16.mxu0 0
    %540 = vmatpush1.bf16.msra.mxu0 0
    %541 = vmatprep.subr.bf16.mxu0 0
    %542 = vmatpush1.bf16.msra.mxu0 0
    %543 = vmatprep.subr.bf16.mxu0 0
    %544 = vmatpush1.bf16.msra.mxu0 0
    %545 = vmatprep.subr.bf16.mxu0 0
    %546 = vmatpush1.bf16.msra.mxu0 0
    %547 = vmatprep.mubr.bf16.mxu0 0
    %548 = vmatmul.mubr.bf16.gmra.mrb[0].mxu0 %v513
    %v549 = vpop.f32.mrb[0].mxu0
    %v550 = vadd.f32 %v495, %v549
    %v551 = vpop.f32.mrb[0].mxu0
    %v552 = vpop.f32.mrb[0].mxu0
    %v553 = vpop.f32.mrb[0].mxu0
    %554 = vdwg.mxu0
    %v555 = vlaneseq
    %v556 = vshrl.u32 %v555, 7
    %v557 = vsub.s32 6, %v556
    %v558 = vrot.slane %v35, %v557
    %v559 = vadd.f32 %v550, %v558
    %v560 = vmax.f32 %v559, 0.0
    %v561 = vpack.c.bf16 %v560, %v560
    %s562 = scalar_lea.vmem [#allocation2], 128
    %v563 = vld [vmem:[%s562] sm:$0xf]
    %v564 = vld [vmem:[%s562 + $0x4] sm:$0xf]
    %v565 = vld [vmem:[%s562 + $0x8] sm:$0xf]
    %v566 = vld [vmem:[%s562 + $0xc] sm:$0xf]
    %v567 = vlaneseq
    %v568 = vshrl.u32 %v567, 7
    %v569 = vsub.s32 7, %v568
    %v570 = vrot.slane %v35, %v569
    %v575 = vunpack.c.l.b16 %v563
    %v576 = vunpack.c.l.b16 %v564
    %v577 = vunpack.c.l.b16 %v565
    %v578 = vunpack.c.l.b16 %v566
    %v579 = vpack.c.b16 %v576, %v575
    %v580 = vpack.c.b16 %v578, %v577
    %v584 = vsel %vm59, %v561, 0
    %586 = vmatprep.subr.bf16.mxu0 0
    %587 = vmatpush1.bf16.msra.mxu0 %v579
    %588 = vmatprep.subr.bf16.mxu0 0
    %589 = vmatpush1.bf16.msra.mxu0 %v580
    %590 = vmatprep.subr.bf16.mxu0 0
    %591 = vmatpush1.bf16.msra.mxu0 0
    %592 = vmatprep.subr.bf16.mxu0 0
    %593 = vmatpush1.bf16.msra.mxu0 0
    %594 = vmatprep.subr.bf16.mxu0 0
    %595 = vmatpush1.bf16.msra.mxu0 0
    %596 = vmatprep.subr.bf16.mxu0 0
    %597 = vmatpush1.bf16.msra.mxu0 0
    %598 = vmatprep.subr.bf16.mxu0 0
    %599 = vmatpush1.bf16.msra.mxu0 0
    %600 = vmatprep.subr.bf16.mxu0 0
    %601 = vmatpush1.bf16.msra.mxu0 0
    %602 = vmatprep.subr.bf16.mxu0 0
    %603 = vmatpush1.bf16.msra.mxu0 0
    %604 = vmatprep.subr.bf16.mxu0 0
    %605 = vmatpush1.bf16.msra.mxu0 0
    %606 = vmatprep.subr.bf16.mxu0 0
    %607 = vmatpush1.bf16.msra.mxu0 0
    %608 = vmatprep.subr.bf16.mxu0 0
    %609 = vmatpush1.bf16.msra.mxu0 0
    %610 = vmatprep.subr.bf16.mxu0 0
    %611 = vmatpush1.bf16.msra.mxu0 0
    %612 = vmatprep.subr.bf16.mxu0 0
    %613 = vmatpush1.bf16.msra.mxu0 0
    %614 = vmatprep.subr.bf16.mxu0 0
    %615 = vmatpush1.bf16.msra.mxu0 0
    %616 = vmatprep.subr.bf16.mxu0 0
    %617 = vmatpush1.bf16.msra.mxu0 0
    %618 = vmatprep.mubr.bf16.mxu0 0
    %619 = vmatmul.mubr.bf16.gmra.mrb[0].mxu0 %v584
    %v620 = vpop.f32.mrb[0].mxu0
    %v621 = vadd.f32 %v570, %v620
    %v622 = vpop.f32.mrb[0].mxu0
    %v623 = vpop.f32.mrb[0].mxu0
    %v624 = vpop.f32.mrb[0].mxu0
    %625 = vdwg.mxu0
    %v626 = vmax.f32 %v621, 0.0
    %v627 = vpack.c.bf16 %v626, %v626
    %s628 = scalar_lea.vmem [#allocation2], 144
    %v629 = vld [vmem:[%s628] sm:$0xf]
    %v630 = vld [vmem:[%s628 + $0x4] sm:$0xf]
    %v631 = vld [vmem:[%s628 + $0x8] sm:$0xf]
    %v632 = vld [vmem:[%s628 + $0xc] sm:$0xf]
    %v633 = vlaneseq
    %v634 = vshrl.u32 %v633, 7
    %v635 = vsub.s32 0, %v634
    %v636 = vrot.slane %v36, %v635
    %v641 = vunpack.c.l.b16 %v629
    %v642 = vunpack.c.l.b16 %v630
    %v643 = vunpack.c.l.b16 %v631
    %v644 = vunpack.c.l.b16 %v632
    %v645 = vpack.c.b16 %v642, %v641
    %v646 = vpack.c.b16 %v644, %v643
    %v650 = vsel %vm59, %v627, 0
    %652 = vmatprep.subr.bf16.mxu0 0
    %653 = vmatpush1.bf16.msra.mxu0 %v645
    %654 = vmatprep.subr.bf16.mxu0 0
    %655 = vmatpush1.bf16.msra.mxu0 %v646
    %656 = vmatprep.subr.bf16.mxu0 0
    %657 = vmatpush1.bf16.msra.mxu0 0
    %658 = vmatprep.subr.bf16.mxu0 0
    %659 = vmatpush1.bf16.msra.mxu0 0
    %660 = vmatprep.subr.bf16.mxu0 0
    %661 = vmatpush1.bf16.msra.mxu0 0
    %662 = vmatprep.subr.bf16.mxu0 0
    %663 = vmatpush1.bf16.msra.mxu0 0
    %664 = vmatprep.subr.bf16.mxu0 0
    %665 = vmatpush1.bf16.msra.mxu0 0
    %666 = vmatprep.subr.bf16.mxu0 0
    %667 = vmatpush1.bf16.msra.mxu0 0
    %668 = vmatprep.subr.bf16.mxu0 0
    %669 = vmatpush1.bf16.msra.mxu0 0
    %670 = vmatprep.subr.bf16.mxu0 0
    %671 = vmatpush1.bf16.msra.mxu0 0
    %672 = vmatprep.subr.bf16.mxu0 0
    %673 = vmatpush1.bf16.msra.mxu0 0
    %674 = vmatprep.subr.bf16.mxu0 0
    %675 = vmatpush1.bf16.msra.mxu0 0
    %676 = vmatprep.subr.bf16.mxu0 0
    %677 = vmatpush1.bf16.msra.mxu0 0
    %678 = vmatprep.subr.bf16.mxu0 0
    %679 = vmatpush1.bf16.msra.mxu0 0
    %680 = vmatprep.subr.bf16.mxu0 0
    %681 = vmatpush1.bf16.msra.mxu0 0
    %682 = vmatprep.subr.bf16.mxu0 0
    %683 = vmatpush1.bf16.msra.mxu0 0
    %684 = vmatprep.mubr.bf16.mxu0 0
    %685 = vmatmul.mubr.bf16.gmra.mrb[0].mxu0 %v650
    %v686 = vpop.f32.mrb[0].mxu0
    %v687 = vadd.f32 %v636, %v686
    %v688 = vpop.f32.mrb[0].mxu0
    %v689 = vpop.f32.mrb[0].mxu0
    %v690 = vpop.f32.mrb[0].mxu0
    %691 = vdwg.mxu0
    %s692 = scalar_lea.vmem [#allocation2], 160
    %v693 = vld [vmem:[%s692] sm:$0xf]
    %v694 = vld [vmem:[%s692 + $0x4] sm:$0xf]
    %v695 = vld [vmem:[%s692 + $0x8] sm:$0xf]
    %v696 = vld [vmem:[%s692 + $0xc] sm:$0xf]
    %v697 = vlaneseq
    %v698 = vshrl.u32 %v697, 7
    %v699 = vsub.s32 1, %v698
    %v700 = vrot.slane %v36, %v699
    %v705 = vunpack.c.l.b16 %v693
    %v706 = vunpack.c.l.b16 %v694
    %v707 = vunpack.c.l.b16 %v695
    %v708 = vunpack.c.l.b16 %v696
    %v709 = vpack.c.b16 %v706, %v705
    %v710 = vpack.c.b16 %v708, %v707
    %713 = vmatprep.subr.bf16.mxu0 0
    %714 = vmatpush1.bf16.msra.mxu0 %v709
    %715 = vmatprep.subr.bf16.mxu0 0
    %716 = vmatpush1.bf16.msra.mxu0 %v710
    %717 = vmatprep.subr.bf16.mxu0 0
    %718 = vmatpush1.bf16.msra.mxu0 0
    %719 = vmatprep.subr.bf16.mxu0 0
    %720 = vmatpush1.bf16.msra.mxu0 0
    %721 = vmatprep.subr.bf16.mxu0 0
    %722 = vmatpush1.bf16.msra.mxu0 0
    %723 = vmatprep.subr.bf16.mxu0 0
    %724 = vmatpush1.bf16.msra.mxu0 0
    %725 = vmatprep.subr.bf16.mxu0 0
    %726 = vmatpush1.bf16.msra.mxu0 0
    %727 = vmatprep.subr.bf16.mxu0 0
    %728 = vmatpush1.bf16.msra.mxu0 0
    %729 = vmatprep.subr.bf16.mxu0 0
    %730 = vmatpush1.bf16.msra.mxu0 0
    %731 = vmatprep.subr.bf16.mxu0 0
    %732 = vmatpush1.bf16.msra.mxu0 0
    %733 = vmatprep.subr.bf16.mxu0 0
    %734 = vmatpush1.bf16.msra.mxu0 0
    %735 = vmatprep.subr.bf16.mxu0 0
    %736 = vmatpush1.bf16.msra.mxu0 0
    %737 = vmatprep.subr.bf16.mxu0 0
    %738 = vmatpush1.bf16.msra.mxu0 0
    %739 = vmatprep.subr.bf16.mxu0 0
    %740 = vmatpush1.bf16.msra.mxu0 0
    %741 = vmatprep.subr.bf16.mxu0 0
    %742 = vmatpush1.bf16.msra.mxu0 0
    %743 = vmatprep.subr.bf16.mxu0 0
    %744 = vmatpush1.bf16.msra.mxu0 0
    %745 = vmatprep.mubr.bf16.mxu0 0
    %746 = vmatmul.mubr.bf16.gmra.mrb[0].mxu0 %v650
    %v747 = vpop.f32.mrb[0].mxu0
    %v748 = vadd.f32 %v700, %v747
    %v749 = vpop.f32.mrb[0].mxu0
    %v750 = vpop.f32.mrb[0].mxu0
    %v751 = vpop.f32.mrb[0].mxu0
    %752 = vdwg.mxu0
    %v753 = vld [vmem:[%s2] sm:$0xff]
    %v754 = vmul.f32 %v748, 0.5
    %v755 = vmul.f32 %v754, 1.442695
    %v756 = vpow.pop %v755
    %v757 = vmul.f32 %v753, %v756
    %v758 = vadd.f32 %v757, %v687
    %s759 = scalar_lea.vmem [#allocation2], 176
    %v760 = vld [vmem:[%s759] sm:$0xf]
    %v761 = vld [vmem:[%s759 + $0x4] sm:$0xf]
    %v762 = vld [vmem:[%s759 + $0x8] sm:$0xf]
    %v763 = vld [vmem:[%s759 + $0xc] sm:$0xf]
    %v764 = vpack.c.bf16 %v758, %v758
    %s765 = scalar_lea.vmem [#allocation2], 192
    %v766 = vld [vmem:[%s765] sm:$0xf]
    %v767 = vld [vmem:[%s765 + $0x4] sm:$0xf]
    %v768 = vld [vmem:[%s765 + $0x8] sm:$0xf]
    %v769 = vld [vmem:[%s765 + $0xc] sm:$0xf]
    %v774 = vunpack.c.l.b16 %v766
    %v775 = vunpack.c.l.b16 %v767
    %v776 = vunpack.c.l.b16 %v768
    %v777 = vunpack.c.l.b16 %v769
    %v778 = vpack.c.b16 %v775, %v774
    %v779 = vpack.c.b16 %v777, %v776
    %v783 = vsel %vm59, %v764, 0
    %785 = vmatprep.subr.bf16.mxu0 0
    %786 = vmatpush1.bf16.msra.mxu0 %v778
    %787 = vmatprep.subr.bf16.mxu0 0
    %788 = vmatpush1.bf16.msra.mxu0 %v779
    %789 = vmatprep.subr.bf16.mxu0 0
    %790 = vmatpush1.bf16.msra.mxu0 0
    %791 = vmatprep.subr.bf16.mxu0 0
    %792 = vmatpush1.bf16.msra.mxu0 0
    %793 = vmatprep.subr.bf16.mxu0 0
    %794 = vmatpush1.bf16.msra.mxu0 0
    %795 = vmatprep.subr.bf16.mxu0 0
    %796 = vmatpush1.bf16.msra.mxu0 0
    %797 = vmatprep.subr.bf16.mxu0 0
    %798 = vmatpush1.bf16.msra.mxu0 0
    %799 = vmatprep.subr.bf16.mxu0 0
    %800 = vmatpush1.bf16.msra.mxu0 0
    %801 = vmatprep.subr.bf16.mxu0 0
    %802 = vmatpush1.bf16.msra.mxu0 0
    %803 = vmatprep.subr.bf16.mxu0 0
    %804 = vmatpush1.bf16.msra.mxu0 0
    %805 = vmatprep.subr.bf16.mxu0 0
    %806 = vmatpush1.bf16.msra.mxu0 0
    %807 = vmatprep.subr.bf16.mxu0 0
    %808 = vmatpush1.bf16.msra.mxu0 0
    %809 = vmatprep.subr.bf16.mxu0 0
    %810 = vmatpush1.bf16.msra.mxu0 0
    %811 = vmatprep.subr.bf16.mxu0 0
    %812 = vmatpush1.bf16.msra.mxu0 0
    %813 = vmatprep.subr.bf16.mxu0 0
    %814 = vmatpush1.bf16.msra.mxu0 0
    %815 = vmatprep.subr.bf16.mxu0 0
    %816 = vmatpush1.bf16.msra.mxu0 0
    %817 = vmatprep.mubr.bf16.mxu0 0
    %818 = vmatmul.mubr.bf16.gmra.mrb[0].mxu0 %v783
    %v819 = vpop.f32.mrb[0].mxu0
    %v820 = vadd.f32 0.0, %v819
    %v821 = vpop.f32.mrb[0].mxu0
    %v822 = vpop.f32.mrb[0].mxu0
    %v823 = vpop.f32.mrb[0].mxu0
    %824 = vdwg.mxu0
    %v829 = vunpack.c.l.b16 %v760
    %v830 = vunpack.c.l.b16 %v761
    %v831 = vunpack.c.l.b16 %v762
    %v832 = vunpack.c.l.b16 %v763
    %v833 = vpack.c.b16 %v830, %v829
    %v834 = vpack.c.b16 %v832, %v831
    %837 = vmatprep.subr.bf16.mxu0 0
    %838 = vmatpush1.bf16.msra.mxu0 %v833
    %839 = vmatprep.subr.bf16.mxu0 0
    %840 = vmatpush1.bf16.msra.mxu0 %v834
    %841 = vmatprep.subr.bf16.mxu0 0
    %842 = vmatpush1.bf16.msra.mxu0 0
    %843 = vmatprep.subr.bf16.mxu0 0
    %844 = vmatpush1.bf16.msra.mxu0 0
    %845 = vmatprep.subr.bf16.mxu0 0
    %846 = vmatpush1.bf16.msra.mxu0 0
    %847 = vmatprep.subr.bf16.mxu0 0
    %848 = vmatpush1.bf16.msra.mxu0 0
    %849 = vmatprep.subr.bf16.mxu0 0
    %850 = vmatpush1.bf16.msra.mxu0 0
    %851 = vmatprep.subr.bf16.mxu0 0
    %852 = vmatpush1.bf16.msra.mxu0 0
    %853 = vmatprep.subr.bf16.mxu0 0
    %854 = vmatpush1.bf16.msra.mxu0 0
    %855 = vmatprep.subr.bf16.mxu0 0
    %856 = vmatpush1.bf16.msra.mxu0 0
    %857 = vmatprep.subr.bf16.mxu0 0
    %858 = vmatpush1.bf16.msra.mxu0 0
    %859 = vmatprep.subr.bf16.mxu0 0
    %860 = vmatpush1.bf16.msra.mxu0 0
    %861 = vmatprep.subr.bf16.mxu0 0
    %862 = vmatpush1.bf16.msra.mxu0 0
    %863 = vmatprep.subr.bf16.mxu0 0
    %864 = vmatpush1.bf16.msra.mxu0 0
    %865 = vmatprep.subr.bf16.mxu0 0
    %866 = vmatpush1.bf16.msra.mxu0 0
    %867 = vmatprep.subr.bf16.mxu0 0
    %868 = vmatpush1.bf16.msra.mxu0 0
    %869 = vmatprep.mubr.bf16.mxu0 0
    %870 = vmatmul.mubr.bf16.gmra.mrb[0].mxu0 %v513
    %v871 = vpop.f32.mrb[0].mxu0
    %v872 = vadd.f32 %v820, %v871
    %v873 = vpop.f32.mrb[0].mxu0
    %v874 = vpop.f32.mrb[0].mxu0
    %v875 = vpop.f32.mrb[0].mxu0
    %876 = vdwg.mxu0
    %v877 = vlaneseq
    %v878 = vshrl.u32 %v877, 7
    %v879 = vsub.s32 2, %v878
    %v880 = vrot.slane %v36, %v879
    %v881 = vadd.f32 %v872, %v880
    %v882 = vmax.f32 %v881, 0.0
    %v883 = vpack.c.bf16 %v882, %v882
    %s884 = scalar_lea.vmem [#allocation2], 208
    %v885 = vld [vmem:[%s884] sm:$0xf]
    %v886 = vld [vmem:[%s884 + $0x4] sm:$0xf]
    %v887 = vld [vmem:[%s884 + $0x8] sm:$0xf]
    %v888 = vld [vmem:[%s884 + $0xc] sm:$0xf]
    %v889 = vlaneseq
    %v890 = vshrl.u32 %v889, 7
    %v891 = vsub.s32 3, %v890
    %v892 = vrot.slane %v36, %v891
    %v897 = vunpack.c.l.b16 %v885
    %v898 = vunpack.c.l.b16 %v886
    %v899 = vunpack.c.l.b16 %v887
    %v900 = vunpack.c.l.b16 %v888
    %v901 = vpack.c.b16 %v898, %v897
    %v902 = vpack.c.b16 %v900, %v899
    %v906 = vsel %vm59, %v883, 0
    %908 = vmatprep.subr.bf16.mxu0 0
    %909 = vmatpush1.bf16.msra.mxu0 %v901
    %910 = vmatprep.subr.bf16.mxu0 0
    %911 = vmatpush1.bf16.msra.mxu0 %v902
    %912 = vmatprep.subr.bf16.mxu0 0
    %913 = vmatpush1.bf16.msra.mxu0 0
    %914 = vmatprep.subr.bf16.mxu0 0
    %915 = vmatpush1.bf16.msra.mxu0 0
    %916 = vmatprep.subr.bf16.mxu0 0
    %917 = vmatpush1.bf16.msra.mxu0 0
    %918 = vmatprep.subr.bf16.mxu0 0
    %919 = vmatpush1.bf16.msra.mxu0 0
    %920 = vmatprep.subr.bf16.mxu0 0
    %921 = vmatpush1.bf16.msra.mxu0 0
    %922 = vmatprep.subr.bf16.mxu0 0
    %923 = vmatpush1.bf16.msra.mxu0 0
    %924 = vmatprep.subr.bf16.mxu0 0
    %925 = vmatpush1.bf16.msra.mxu0 0
    %926 = vmatprep.subr.bf16.mxu0 0
    %927 = vmatpush1.bf16.msra.mxu0 0
    %928 = vmatprep.subr.bf16.mxu0 0
    %929 = vmatpush1.bf16.msra.mxu0 0
    %930 = vmatprep.subr.bf16.mxu0 0
    %931 = vmatpush1.bf16.msra.mxu0 0
    %932 = vmatprep.subr.bf16.mxu0 0
    %933 = vmatpush1.bf16.msra.mxu0 0
    %934 = vmatprep.subr.bf16.mxu0 0
    %935 = vmatpush1.bf16.msra.mxu0 0
    %936 = vmatprep.subr.bf16.mxu0 0
    %937 = vmatpush1.bf16.msra.mxu0 0
    %938 = vmatprep.subr.bf16.mxu0 0
    %939 = vmatpush1.bf16.msra.mxu0 0
    %940 = vmatprep.mubr.bf16.mxu0 0
    %941 = vmatmul.mubr.bf16.gmra.mrb[0].mxu0 %v906
    %v942 = vpop.f32.mrb[0].mxu0
    %v943 = vadd.f32 %v892, %v942
    %v944 = vpop.f32.mrb[0].mxu0
    %v945 = vpop.f32.mrb[0].mxu0
    %v946 = vpop.f32.mrb[0].mxu0
    %947 = vdwg.mxu0
    %v948 = vmax.f32 %v943, 0.0
    %v949 = vpack.c.bf16 %v948, %v948
    %s950 = scalar_lea.vmem [#allocation2], 224
    %v951 = vld [vmem:[%s950] sm:$0xf]
    %v952 = vld [vmem:[%s950 + $0x4] sm:$0xf]
    %v953 = vld [vmem:[%s950 + $0x8] sm:$0xf]
    %v954 = vld [vmem:[%s950 + $0xc] sm:$0xf]
    %v955 = vlaneseq
    %v956 = vshrl.u32 %v955, 7
    %v957 = vsub.s32 4, %v956
    %v958 = vrot.slane %v36, %v957
    %v963 = vunpack.c.l.b16 %v951
    %v964 = vunpack.c.l.b16 %v952
    %v965 = vunpack.c.l.b16 %v953
    %v966 = vunpack.c.l.b16 %v954
    %v967 = vpack.c.b16 %v964, %v963
    %v968 = vpack.c.b16 %v966, %v965
    %v972 = vsel %vm59, %v949, 0
    %974 = vmatprep.subr.bf16.mxu0 0
    %975 = vmatpush1.bf16.msra.mxu0 %v967
    %976 = vmatprep.subr.bf16.mxu0 0
    %977 = vmatpush1.bf16.msra.mxu0 %v968
    %978 = vmatprep.subr.bf16.mxu0 0
    %979 = vmatpush1.bf16.msra.mxu0 0
    %980 = vmatprep.subr.bf16.mxu0 0
    %981 = vmatpush1.bf16.msra.mxu0 0
    %982 = vmatprep.subr.bf16.mxu0 0
    %983 = vmatpush1.bf16.msra.mxu0 0
    %984 = vmatprep.subr.bf16.mxu0 0
    %985 = vmatpush1.bf16.msra.mxu0 0
    %986 = vmatprep.subr.bf16.mxu0 0
    %987 = vmatpush1.bf16.msra.mxu0 0
    %988 = vmatprep.subr.bf16.mxu0 0
    %989 = vmatpush1.bf16.msra.mxu0 0
    %990 = vmatprep.subr.bf16.mxu0 0
    %991 = vmatpush1.bf16.msra.mxu0 0
    %992 = vmatprep.subr.bf16.mxu0 0
    %993 = vmatpush1.bf16.msra.mxu0 0
    %994 = vmatprep.subr.bf16.mxu0 0
    %995 = vmatpush1.bf16.msra.mxu0 0
    %996 = vmatprep.subr.bf16.mxu0 0
    %997 = vmatpush1.bf16.msra.mxu0 0
    %998 = vmatprep.subr.bf16.mxu0 0
    %999 = vmatpush1.bf16.msra.mxu0 0
    %1000 = vmatprep.subr.bf16.mxu0 0
    %1001 = vmatpush1.bf16.msra.mxu0 0
    %1002 = vmatprep.subr.bf16.mxu0 0
    %1003 = vmatpush1.bf16.msra.mxu0 0
    %1004 = vmatprep.subr.bf16.mxu0 0
    %1005 = vmatpush1.bf16.msra.mxu0 0
    %1006 = vmatprep.mubr.bf16.mxu0 0
    %1007 = vmatmul.mubr.bf16.gmra.mrb[0].mxu0 %v972
    %v1008 = vpop.f32.mrb[0].mxu0
    %v1009 = vadd.f32 %v958, %v1008
    %v1010 = vpop.f32.mrb[0].mxu0
    %v1011 = vpop.f32.mrb[0].mxu0
    %v1012 = vpop.f32.mrb[0].mxu0
    %1013 = vdwg.mxu0
    %1014 = vst [vmem:[%s5] sm:$0xff] %v1009
    %s1015 = scalar_lea.vmem %s5, 8
    %1016 = vst [vmem:[%s1015] sm:$0xff] %v687
    %s1017 = scalar_lea.vmem %s5, 16
    %1018 = vst [vmem:[%s1017] sm:$0xff] %v748
    // Predicated region
    $region26: #{cvae_forward_train.1} parent=1 // pred_check
      _
    $region27: #{cvae_forward_train.1} parent=1 // pred_check_branch
      %1020 = sbr.rel (0) target = $region29
    $region28: #{cvae_forward_train.1} parent=1 // pred_region
      _
    $region29: #{cvae_forward_train.1} parent=1 // pred_fallthru
      _
    // Predicated region
    $region30: #{cvae_forward_train.1} parent=1 // pred_check
      _
    $region31: #{cvae_forward_train.1} parent=1 // pred_check_branch
      %1022 = sbr.rel (0) target = $region33
    $region32: #{cvae_forward_train.1} parent=1 // pred_region
      _
    $region33: #{cvae_forward_train.1} parent=1 // pred_fallthru
      _
    %1023 = vsyncpa [#allocation3], 1

</llo_original>
